<compile_context>
chip_gen: v7x
topology: tpu7x:2x2x1
jax: 0.10.0
libtpu: 0.0.40
codegen_flags: <defaults>
</compile_context>

<pallas_src>
import jax
import jax.numpy as jnp
from jax.experimental import pallas as pl
from jax.experimental.pallas import tpu as pltpu

D_IN = 784


def _round_up(n, m):
    return ((n + m - 1) // m) * m


# ---------------------------------------------------------------------------
# Kernel: full 6-layer MLP on one batch tile.
# x: (tile_b, 784) f32; weights bf16 (in, out) except w4 (2, 128) f32;
# biases f32 (1, out); output (tile_b, 784) bf16.
# ---------------------------------------------------------------------------
def _net_kernel(x_ref,
                w1_ref, b1_ref, w2_ref, b2_ref, w3_ref, b3_ref,
                w4_ref, b4_ref, w5_ref, b5_ref, w6_ref, b6_ref,
                o_ref):

    def dense(h, w_ref, b_ref):
        # bf16 MXU operands, f32 accumulate; bias add stays fused with the
        # following relu (no inner loop, so nothing is re-broadcast).
        return (jnp.dot(h.astype(jnp.bfloat16), w_ref[...],
                        preferred_element_type=jnp.float32)
                + b_ref[...])

    x = x_ref[...].astype(jnp.bfloat16)                   # f32 -> bf16 (VPU)
    h = jnp.maximum(dense(x, w1_ref, b1_ref), 0.0)        # 784 -> 256
    h = jnp.maximum(dense(h, w2_ref, b2_ref), 0.0)        # 256 -> 128
    h = jnp.maximum(dense(h, w3_ref, b3_ref), 0.0)        # 128 ->   2

    # dec1 (2 -> 128): K=2 matmul would waste the MXU contraction rows; do it
    # as a VPU outer product in f32 (w4 is stored f32, it is only 1 KiB).
    w4 = w4_ref[...]                                      # (2, 128) f32
    h = h[:, 0:1] * w4[0:1, :] + h[:, 1:2] * w4[1:2, :] + b4_ref[...]
    h = jnp.maximum(h, 0.0)                               #   2 -> 128

    h = jnp.maximum(dense(h, w5_ref, b5_ref), 0.0)        # 128 -> 256

    # TODO(synk): F.dropout(training=True) would need pltpu.prng_seed /
    # prng_random_bits masking + 1/(1-p) rescale; inference semantics
    # (identity) implemented here.

    z = dense(h, w6_ref, b6_ref)                          # 256 -> 784
    # sigmoid: exp on the EUP + approx reciprocal (EUP slot); bf16 store.
    o_ref[...] = pl.reciprocal(1.0 + jnp.exp(-z), approx=True).astype(o_ref.dtype)


# ---------------------------------------------------------------------------
# Parameter prep: cast matmul weights to bf16 (halves weight DMA/VMEM);
# the tiny dec1 weight stays f32 for the VPU outer product; biases stay f32.
# ---------------------------------------------------------------------------
def prepare_params(params):
    """params: list of (W, b) with W as (in, out) f32, b as (1, out) f32."""
    (w1, b1), (w2, b2), (w3, b3), (w4, b4), (w5, b5), (w6, b6) = params
    return [
        w1.astype(jnp.bfloat16), b1,
        w2.astype(jnp.bfloat16), b2,
        w3.astype(jnp.bfloat16), b3,
        w4.astype(jnp.float32), b4,
        w5.astype(jnp.bfloat16), b5,
        w6.astype(jnp.bfloat16), b6,
    ]


# ---------------------------------------------------------------------------
# Wrapper: pallas_call tiled over the batch dimension only.
# ---------------------------------------------------------------------------
def net_forward(x, prepared, *, tile_b_max=512):
    """x: (B, 784) float32.  prepared: output of prepare_params().

    Returns a (B, 784) bfloat16 array (sigmoid output)."""
    B, d = x.shape
    assert d == D_IN

    # Tile selection:
    #  * block rows must be a multiple of 8 (sublane) OR equal the full batch
    #    dim, so a small ragged B gets a single full-batch block (no padding,
    #    no output strip);
    #  * otherwise clamp the tile to ~B/2 so the grid has >= 2 parallel steps
    #    (both v7x TensorCores get work) without computing dead rows.
    if B % 8 != 0 and B <= tile_b_max:
        tile_b = B
    else:
        tile_b = max(8, min(tile_b_max, _round_up(pl.cdiv(B, 2), 8)))
    grid_b = pl.cdiv(B, tile_b)
    b_pad = grid_b * tile_b

    # Batch-only pad (feature dim is never padded); no-op in the common case.
    x_in = x if b_pad == B else jnp.pad(x, ((0, b_pad - B), (0, 0)))

    # Weight/bias blocks: whole array, same block every grid step (fetched
    # once; default double-buffering of ~1 MiB of weights is noise).
    in_specs = [pl.BlockSpec((tile_b, D_IN), lambda i: (i, 0))]
    in_specs += [pl.BlockSpec(p.shape, lambda i: (0, 0)) for p in prepared]

    grid_spec = pltpu.PrefetchScalarGridSpec(
        num_scalar_prefetch=0,
        grid=(grid_b,),
        in_specs=in_specs,
        out_specs=pl.BlockSpec((tile_b, D_IN), lambda i: (i, 0)),
    )

    out = pl.pallas_call(
        _net_kernel,
        out_shape=jax.ShapeDtypeStruct((b_pad, D_IN), jnp.bfloat16),
        grid_spec=grid_spec,
        compiler_params=pltpu.CompilerParams(
            dimension_semantics=("parallel",),
            vmem_limit_bytes=48 * 1024 * 1024,  # fits v7x's 64 MiB physical
        ),
    )(x_in, *prepared)

    return out if b_pad == B else out[:B]


# ---------------------------------------------------------------------------
# Deterministic parameter init (PyTorch nn.Linear-style uniform bounds).
# ---------------------------------------------------------------------------
def init_params(key):
    dims = [(784, 256), (256, 128), (128, 2), (2, 128), (128, 256), (256, 784)]
    params = []
    for (fan_in, fan_out) in dims:
        key, kw, kb = jax.random.split(key, 3)
        bound = 1.0 / jnp.sqrt(float(fan_in))
        w = jax.random.uniform(kw, (fan_in, fan_out), jnp.float32, -bound, bound)
        b = jax.random.uniform(kb, (1, fan_out), jnp.float32, -bound, bound)
        params.append((w, b))
    return params


# ---------------------------------------------------------------------------
# Pure-JAX reference mirroring the kernel numerics (bf16 matmuls, f32 rest,
# exact sigmoid) -- the kernel additionally uses an approx reciprocal and a
# bf16 output store.
# ---------------------------------------------------------------------------
def net_forward_ref(x, params):
    def dense(h, w, b):
        return jnp.dot(h.astype(jnp.bfloat16), w.astype(jnp.bfloat16),
                       preferred_element_type=jnp.float32) + b

    h = jnp.maximum(dense(x, *params[0]), 0.0)
    h = jnp.maximum(dense(h, *params[1]), 0.0)
    h = jnp.maximum(dense(h, *params[2]), 0.0)
    w4, b4 = params[3]
    h = jnp.maximum(h @ w4 + b4, 0.0)
    h = jnp.maximum(dense(h, *params[4]), 0.0)
    z = dense(h, *params[5])
    return jax.nn.sigmoid(z)


if __name__ == "__main__":
    key = jax.random.PRNGKey(0)
    key, kx = jax.random.split(key)

    B = 37  # deliberately ragged; wrapper uses a single full-batch block.
    x = jax.random.uniform(kx, (B, 784), jnp.float32)  # MNIST-like input

    params = init_params(key)
    prepared = prepare_params(params)

    out = net_forward(x, prepared)
    out = jax.block_until_ready(out)

    ref = net_forward_ref(x, params)
    assert out.shape == (B, 784)
    assert out.dtype == jnp.bfloat16
    max_err = float(jnp.max(jnp.abs(out.astype(jnp.float32) - ref)))
    # bf16 matmuls + approx reciprocal + bf16 output vs the JAX reference.
    assert max_err < 1e-2, f"max abs error {max_err}"

    print("KERNEL_OK")
</pallas_src>

<mosaic_0001>
module attributes {stable_mosaic.version = 11 : i64} {
  func.func @_net_kernel(%arg0: i32, %arg1: memref<37x784xf32, #tpu.memory_space<vmem>>, %arg2: memref<784x256xbf16, #tpu.memory_space<vmem>>, %arg3: memref<1x256xf32, #tpu.memory_space<vmem>>, %arg4: memref<256x128xbf16, #tpu.memory_space<vmem>>, %arg5: memref<1x128xf32, #tpu.memory_space<vmem>>, %arg6: memref<128x2xbf16, #tpu.memory_space<vmem>>, %arg7: memref<1x2xf32, #tpu.memory_space<vmem>>, %arg8: memref<2x128xf32, #tpu.memory_space<vmem>>, %arg9: memref<1x128xf32, #tpu.memory_space<vmem>>, %arg10: memref<128x256xbf16, #tpu.memory_space<vmem>>, %arg11: memref<1x256xf32, #tpu.memory_space<vmem>>, %arg12: memref<256x784xbf16, #tpu.memory_space<vmem>>, %arg13: memref<1x784xf32, #tpu.memory_space<vmem>>, %arg14: memref<37x784xbf16, #tpu.memory_space<vmem>>) attributes {dimension_semantics = [#tpu.dimension_semantics<parallel>], iteration_bounds = array<i64: 1>, scalar_prefetch = 0 : i64, scratch_operands = 0 : i64, tpu.core_type = #tpu.core_type<tc>, window_params = [{transform_indices = @transform_0, window_bounds = array<i64: 37, 784>}, {pipeline_mode = #tpu.pipeline_mode<synchronous>, transform_indices = @transform_1, window_bounds = array<i64: 784, 256>}, {pipeline_mode = #tpu.pipeline_mode<synchronous>, transform_indices = @transform_2, window_bounds = array<i64: 1, 256>}, {pipeline_mode = #tpu.pipeline_mode<synchronous>, transform_indices = @transform_3, window_bounds = array<i64: 256, 128>}, {pipeline_mode = #tpu.pipeline_mode<synchronous>, transform_indices = @transform_4, window_bounds = array<i64: 1, 128>}, {pipeline_mode = #tpu.pipeline_mode<synchronous>, transform_indices = @transform_5, window_bounds = array<i64: 128, 2>}, {pipeline_mode = #tpu.pipeline_mode<synchronous>, transform_indices = @transform_6, window_bounds = array<i64: 1, 2>}, {pipeline_mode = #tpu.pipeline_mode<synchronous>, transform_indices = @transform_7, window_bounds = array<i64: 2, 128>}, {pipeline_mode = #tpu.pipeline_mode<synchronous>, transform_indices = @transform_8, window_bounds = array<i64: 1, 128>}, {pipeline_mode = #tpu.pipeline_mode<synchronous>, transform_indices = @transform_9, window_bounds = array<i64: 128, 256>}, {pipeline_mode = #tpu.pipeline_mode<synchronous>, transform_indices = @transform_10, window_bounds = array<i64: 1, 256>}, {pipeline_mode = #tpu.pipeline_mode<synchronous>, transform_indices = @transform_11, window_bounds = array<i64: 256, 784>}, {pipeline_mode = #tpu.pipeline_mode<synchronous>, transform_indices = @transform_12, window_bounds = array<i64: 1, 784>}, {transform_indices = @transform_13, window_bounds = array<i64: 37, 784>}]} {
    %c0 = arith.constant 0 : index
    %c0_0 = arith.constant 0 : index
    %0 = vector.load %arg1[%c0, %c0_0] : memref<37x784xf32, #tpu.memory_space<vmem>>, vector<37x784xf32>
    %1 = arith.truncf %0 : vector<37x784xf32> to vector<37x784xbf16>
    %c0_1 = arith.constant 0 : index
    %c0_2 = arith.constant 0 : index
    %2 = vector.load %arg2[%c0_1, %c0_2] : memref<784x256xbf16, #tpu.memory_space<vmem>>, vector<784x256xbf16>
    %cst = arith.constant dense<0.000000e+00> : vector<37x256xf32>
    %3 = tpu.matmul %1, %2, %cst {dimension_numbers = #tpu.dot_dimension_numbers<[1], [0], [0], [1], [0, 0, 1, 1], [], []>} : vector<37x784xbf16>, vector<784x256xbf16>, vector<37x256xf32> -> vector<37x256xf32>
    %c0_3 = arith.constant 0 : index
    %c0_4 = arith.constant 0 : index
    %4 = vector.load %arg3[%c0_3, %c0_4] : memref<1x256xf32, #tpu.memory_space<vmem>>, vector<1x256xf32>
    %5 = vector.broadcast %4 : vector<1x256xf32> to vector<37x256xf32>
    %6 = arith.addf %3, %5 : vector<37x256xf32>
    %cst_5 = arith.constant 0.000000e+00 : f32
    %7 = vector.broadcast %cst_5 : f32 to vector<37x256xf32>
    %8 = arith.maximumf %6, %7 : vector<37x256xf32>
    %9 = arith.truncf %8 : vector<37x256xf32> to vector<37x256xbf16>
    %c0_6 = arith.constant 0 : index
    %c0_7 = arith.constant 0 : index
    %10 = vector.load %arg4[%c0_6, %c0_7] : memref<256x128xbf16, #tpu.memory_space<vmem>>, vector<256x128xbf16>
    %cst_8 = arith.constant dense<0.000000e+00> : vector<37x128xf32>
    %11 = tpu.matmul %9, %10, %cst_8 {dimension_numbers = #tpu.dot_dimension_numbers<[1], [0], [0], [1], [0, 0, 1, 1], [], []>} : vector<37x256xbf16>, vector<256x128xbf16>, vector<37x128xf32> -> vector<37x128xf32>
    %c0_9 = arith.constant 0 : index
    %c0_10 = arith.constant 0 : index
    %12 = vector.load %arg5[%c0_9, %c0_10] : memref<1x128xf32, #tpu.memory_space<vmem>>, vector<1x128xf32>
    %13 = vector.broadcast %12 : vector<1x128xf32> to vector<37x128xf32>
    %14 = arith.addf %11, %13 : vector<37x128xf32>
    %cst_11 = arith.constant 0.000000e+00 : f32
    %15 = vector.broadcast %cst_11 : f32 to vector<37x128xf32>
    %16 = arith.maximumf %14, %15 : vector<37x128xf32>
    %17 = arith.truncf %16 : vector<37x128xf32> to vector<37x128xbf16>
    %c0_12 = arith.constant 0 : index
    %c0_13 = arith.constant 0 : index
    %18 = vector.load %arg6[%c0_12, %c0_13] : memref<128x2xbf16, #tpu.memory_space<vmem>>, vector<128x2xbf16>
    %cst_14 = arith.constant dense<0.000000e+00> : vector<37x2xf32>
    %19 = tpu.matmul %17, %18, %cst_14 {dimension_numbers = #tpu.dot_dimension_numbers<[1], [0], [0], [1], [0, 0, 1, 1], [], []>} : vector<37x128xbf16>, vector<128x2xbf16>, vector<37x2xf32> -> vector<37x2xf32>
    %c0_15 = arith.constant 0 : index
    %c0_16 = arith.constant 0 : index
    %20 = vector.load %arg7[%c0_15, %c0_16] : memref<1x2xf32, #tpu.memory_space<vmem>>, vector<1x2xf32>
    %21 = vector.broadcast %20 : vector<1x2xf32> to vector<37x2xf32>
    %22 = arith.addf %19, %21 : vector<37x2xf32>
    %cst_17 = arith.constant 0.000000e+00 : f32
    %23 = vector.broadcast %cst_17 : f32 to vector<37x2xf32>
    %24 = arith.maximumf %22, %23 : vector<37x2xf32>
    %c0_18 = arith.constant 0 : index
    %c0_19 = arith.constant 0 : index
    %25 = vector.load %arg8[%c0_18, %c0_19] : memref<2x128xf32, #tpu.memory_space<vmem>>, vector<2x128xf32>
    %26 = vector.extract_strided_slice %24 {offsets = [0, 0], sizes = [37, 1], strides = [1, 1]} : vector<37x2xf32> to vector<37x1xf32>
    %27 = vector.extract_strided_slice %25 {offsets = [0, 0], sizes = [1, 128], strides = [1, 1]} : vector<2x128xf32> to vector<1x128xf32>
    %28 = vector.broadcast %26 : vector<37x1xf32> to vector<37x128xf32>
    %29 = vector.broadcast %27 : vector<1x128xf32> to vector<37x128xf32>
    %30 = arith.mulf %28, %29 : vector<37x128xf32>
    %31 = vector.extract_strided_slice %24 {offsets = [0, 1], sizes = [37, 1], strides = [1, 1]} : vector<37x2xf32> to vector<37x1xf32>
    %32 = vector.extract_strided_slice %25 {offsets = [1, 0], sizes = [1, 128], strides = [1, 1]} : vector<2x128xf32> to vector<1x128xf32>
    %33 = vector.broadcast %31 : vector<37x1xf32> to vector<37x128xf32>
    %34 = vector.broadcast %32 : vector<1x128xf32> to vector<37x128xf32>
    %35 = arith.mulf %33, %34 : vector<37x128xf32>
    %36 = arith.addf %30, %35 : vector<37x128xf32>
    %c0_20 = arith.constant 0 : index
    %c0_21 = arith.constant 0 : index
    %37 = vector.load %arg9[%c0_20, %c0_21] : memref<1x128xf32, #tpu.memory_space<vmem>>, vector<1x128xf32>
    %38 = vector.broadcast %37 : vector<1x128xf32> to vector<37x128xf32>
    %39 = arith.addf %36, %38 : vector<37x128xf32>
    %cst_22 = arith.constant 0.000000e+00 : f32
    %40 = vector.broadcast %cst_22 : f32 to vector<37x128xf32>
    %41 = arith.maximumf %39, %40 : vector<37x128xf32>
    %42 = arith.truncf %41 : vector<37x128xf32> to vector<37x128xbf16>
    %c0_23 = arith.constant 0 : index
    %c0_24 = arith.constant 0 : index
    %43 = vector.load %arg10[%c0_23, %c0_24] : memref<128x256xbf16, #tpu.memory_space<vmem>>, vector<128x256xbf16>
    %cst_25 = arith.constant dense<0.000000e+00> : vector<37x256xf32>
    %44 = tpu.matmul %42, %43, %cst_25 {dimension_numbers = #tpu.dot_dimension_numbers<[1], [0], [0], [1], [0, 0, 1, 1], [], []>} : vector<37x128xbf16>, vector<128x256xbf16>, vector<37x256xf32> -> vector<37x256xf32>
    %c0_26 = arith.constant 0 : index
    %c0_27 = arith.constant 0 : index
    %45 = vector.load %arg11[%c0_26, %c0_27] : memref<1x256xf32, #tpu.memory_space<vmem>>, vector<1x256xf32>
    %46 = vector.broadcast %45 : vector<1x256xf32> to vector<37x256xf32>
    %47 = arith.addf %44, %46 : vector<37x256xf32>
    %cst_28 = arith.constant 0.000000e+00 : f32
    %48 = vector.broadcast %cst_28 : f32 to vector<37x256xf32>
    %49 = arith.maximumf %47, %48 : vector<37x256xf32>
    %50 = arith.truncf %49 : vector<37x256xf32> to vector<37x256xbf16>
    %c0_29 = arith.constant 0 : index
    %c0_30 = arith.constant 0 : index
    %51 = vector.load %arg12[%c0_29, %c0_30] : memref<256x784xbf16, #tpu.memory_space<vmem>>, vector<256x784xbf16>
    %cst_31 = arith.constant dense<0.000000e+00> : vector<37x784xf32>
    %52 = tpu.matmul %50, %51, %cst_31 {dimension_numbers = #tpu.dot_dimension_numbers<[1], [0], [0], [1], [0, 0, 1, 1], [], []>} : vector<37x256xbf16>, vector<256x784xbf16>, vector<37x784xf32> -> vector<37x784xf32>
    %c0_32 = arith.constant 0 : index
    %c0_33 = arith.constant 0 : index
    %53 = vector.load %arg13[%c0_32, %c0_33] : memref<1x784xf32, #tpu.memory_space<vmem>>, vector<1x784xf32>
    %54 = vector.broadcast %53 : vector<1x784xf32> to vector<37x784xf32>
    %55 = arith.addf %52, %54 : vector<37x784xf32>
    %cst_34 = arith.constant 0.000000e+00 : f32
    %56 = vector.broadcast %cst_34 : f32 to vector<37x784xf32>
    %57 = arith.subf %56, %55 : vector<37x784xf32>
    %58 = math.exp %57 : vector<37x784xf32>
    %cst_35 = arith.constant 1.000000e+00 : f32
    %59 = vector.broadcast %cst_35 : f32 to vector<37x784xf32>
    %60 = arith.addf %59, %58 : vector<37x784xf32>
    %61 = tpu.reciprocal %60 {approx = true} : vector<37x784xf32> -> vector<37x784xf32>
    %62 = arith.truncf %61 : vector<37x784xf32> to vector<37x784xbf16>
    %c0_36 = arith.constant 0 : index
    %c0_37 = arith.constant 0 : index
    %63 = vector.load %arg14[%c0_36, %c0_37] : memref<37x784xbf16, #tpu.memory_space<vmem>>, vector<37x784xbf16>
    tpu.vector_store %arg14[%c0_36, %c0_37], %62 {strides = array<i32>} : memref<37x784xbf16, #tpu.memory_space<vmem>>, vector<37x784xbf16>,
    return
  }
  func.func @transform_0(%arg0: i32) -> (i32, i32) {
    %c0_i32 = arith.constant 0 : i32
    %c0_i32_0 = arith.constant 0 : i32
    return %arg0, %c0_i32 : i32, i32
  }
  func.func @transform_1(%arg0: i32) -> (i32, i32) {
    %c0_i32 = arith.constant 0 : i32
    %c0_i32_0 = arith.constant 0 : i32
    %c0_i32_1 = arith.constant 0 : i32
    return %c0_i32, %c0_i32_0 : i32, i32
  }
  func.func @transform_2(%arg0: i32) -> (i32, i32) {
    %c0_i32 = arith.constant 0 : i32
    %c0_i32_0 = arith.constant 0 : i32
    %c0_i32_1 = arith.constant 0 : i32
    return %c0_i32, %c0_i32_0 : i32, i32
  }
  func.func @transform_3(%arg0: i32) -> (i32, i32) {
    %c0_i32 = arith.constant 0 : i32
    %c0_i32_0 = arith.constant 0 : i32
    %c0_i32_1 = arith.constant 0 : i32
    return %c0_i32, %c0_i32_0 : i32, i32
  }
  func.func @transform_4(%arg0: i32) -> (i32, i32) {
    %c0_i32 = arith.constant 0 : i32
    %c0_i32_0 = arith.constant 0 : i32
    %c0_i32_1 = arith.constant 0 : i32
    return %c0_i32, %c0_i32_0 : i32, i32
  }
  func.func @transform_5(%arg0: i32) -> (i32, i32) {
    %c0_i32 = arith.constant 0 : i32
    %c0_i32_0 = arith.constant 0 : i32
    %c0_i32_1 = arith.constant 0 : i32
    return %c0_i32, %c0_i32_0 : i32, i32
  }
  func.func @transform_6(%arg0: i32) -> (i32, i32) {
    %c0_i32 = arith.constant 0 : i32
    %c0_i32_0 = arith.constant 0 : i32
    %c0_i32_1 = arith.constant 0 : i32
    return %c0_i32, %c0_i32_0 : i32, i32
  }
  func.func @transform_7(%arg0: i32) -> (i32, i32) {
    %c0_i32 = arith.constant 0 : i32
    %c0_i32_0 = arith.constant 0 : i32
    %c0_i32_1 = arith.constant 0 : i32
    return %c0_i32, %c0_i32_0 : i32, i32
  }
  func.func @transform_8(%arg0: i32) -> (i32, i32) {
    %c0_i32 = arith.constant 0 : i32
    %c0_i32_0 = arith.constant 0 : i32
    %c0_i32_1 = arith.constant 0 : i32
    return %c0_i32, %c0_i32_0 : i32, i32
  }
  func.func @transform_9(%arg0: i32) -> (i32, i32) {
    %c0_i32 = arith.constant 0 : i32
    %c0_i32_0 = arith.constant 0 : i32
    %c0_i32_1 = arith.constant 0 : i32
    return %c0_i32, %c0_i32_0 : i32, i32
  }
  func.func @transform_10(%arg0: i32) -> (i32, i32) {
    %c0_i32 = arith.constant 0 : i32
    %c0_i32_0 = arith.constant 0 : i32
    %c0_i32_1 = arith.constant 0 : i32
    return %c0_i32, %c0_i32_0 : i32, i32
  }
  func.func @transform_11(%arg0: i32) -> (i32, i32) {
    %c0_i32 = arith.constant 0 : i32
    %c0_i32_0 = arith.constant 0 : i32
    %c0_i32_1 = arith.constant 0 : i32
    return %c0_i32, %c0_i32_0 : i32, i32
  }
  func.func @transform_12(%arg0: i32) -> (i32, i32) {
    %c0_i32 = arith.constant 0 : i32
    %c0_i32_0 = arith.constant 0 : i32
    %c0_i32_1 = arith.constant 0 : i32
    return %c0_i32, %c0_i32_0 : i32, i32
  }
  func.func @transform_13(%arg0: i32) -> (i32, i32) {
    %c0_i32 = arith.constant 0 : i32
    %c0_i32_0 = arith.constant 0 : i32
    return %arg0, %c0_i32 : i32, i32
  }
}

</mosaic_0001>

<llo_original>
// kernel: tpu_custom_call.1
$region0: #{tpu_custom_call.1}
  #allocation0 [shape = 'u32[]', space=smem, size = 0x4, offset = 0x4, fixed_abs, tag = 'smem constant byte address 0x4 - core index']
  #allocation1 [shape = 'u32[144,128]{1,0:T(1,128)}', space=vmem, size = 0x12000, scoped, tag = 'internal scratch']
  %s0 = inlined_call_operand.vmem [shape: f32[37,784], index: 0, kind: input, shape index: {}]
  %s1 = inlined_call_operand.vmem [shape: bf16[784,256], index: 1, kind: input, shape index: {}]
  %s2 = inlined_call_operand.vmem [shape: f32[1,256], index: 2, kind: input, shape index: {}]
  %s3 = inlined_call_operand.vmem [shape: bf16[256,128], index: 3, kind: input, shape index: {}]
  %s4 = inlined_call_operand.vmem [shape: f32[1,128], index: 4, kind: input, shape index: {}]
  %s5 = inlined_call_operand.vmem [shape: bf16[128,2], index: 5, kind: input, shape index: {}]
  %s6 = inlined_call_operand.vmem [shape: f32[1,2], index: 6, kind: input, shape index: {}]
  %s7 = inlined_call_operand.vmem [shape: f32[2,128], index: 7, kind: input, shape index: {}]
  %s8 = inlined_call_operand.vmem [shape: f32[1,128], index: 8, kind: input, shape index: {}]
  %s9 = inlined_call_operand.vmem [shape: bf16[128,256], index: 9, kind: input, shape index: {}]
  %s10 = inlined_call_operand.vmem [shape: f32[1,256], index: 10, kind: input, shape index: {}]
  %s11 = inlined_call_operand.vmem [shape: bf16[256,784], index: 11, kind: input, shape index: {}]
  %s12 = inlined_call_operand.vmem [shape: f32[1,784], index: 12, kind: input, shape index: {}]
  %s13 = inlined_call_operand.hbm [shape: bf16[37,784], index: 13, kind: output, shape index: {}]
  %s14 = sld [smem:[#allocation0]]
  $region62: #{tpu_custom_call.1} parent=0
    _
  %s16 = ssub.s32 1, %s14
  %s17 = scalar_select 0, %s16, %s14
  $region1: #{tpu_custom_call.1} parent=0
    #allocation2 [shape = 'u8[71680]{0}', space=vmem, size = 0x11800, scoped, tag = 'output window, operand 0, single buffered']
    #allocation3 [shape = 's32[1]{0}', space=sflag, size = 0x4, scoped, tag = 'scoped memory for tpu_custom_call.1']
    %18 = vsyncpa [#allocation3], 0
    // Predicated region
    $region2: #{tpu_custom_call.1} parent=1 // pred_check
      _
    $region3: #{tpu_custom_call.1} parent=1 // pred_check_branch
      %20 = sbr.rel (0) target = $region5
    $region4: #{tpu_custom_call.1} parent=1 // pred_region
      _
    $region5: #{tpu_custom_call.1} parent=1 // pred_fallthru
      _
    // Predicated region
    $region6: #{tpu_custom_call.1} parent=1 // pred_check
      _
    $region7: #{tpu_custom_call.1} parent=1 // pred_check_branch
      %22 = sbr.rel (0) target = $region9
    $region8: #{tpu_custom_call.1} parent=1 // pred_region
      _
    $region9: #{tpu_custom_call.1} parent=1 // pred_fallthru
      _
    // Predicated region
    $region10: #{tpu_custom_call.1} parent=1 // pred_check
      _
    $region11: #{tpu_custom_call.1} parent=1 // pred_check_branch
      %24 = sbr.rel (0) target = $region13
    $region12: #{tpu_custom_call.1} parent=1 // pred_region
      _
    $region13: #{tpu_custom_call.1} parent=1 // pred_fallthru
      _
    // Predicated region
    $region14: #{tpu_custom_call.1} parent=1 // pred_check
      _
    $region15: #{tpu_custom_call.1} parent=1 // pred_check_branch
      %26 = sbr.rel (0) target = $region17
    $region16: #{tpu_custom_call.1} parent=1 // pred_region
      _
    $region17: #{tpu_custom_call.1} parent=1 // pred_fallthru
      _
    // Predicated region
    $region18: #{tpu_custom_call.1} parent=1 // pred_check
      _
    $region19: #{tpu_custom_call.1} parent=1 // pred_check_branch
      %28 = sbr.rel (0) target = $region21
    $region20: #{tpu_custom_call.1} parent=1 // pred_region
      _
    $region21: #{tpu_custom_call.1} parent=1 // pred_fallthru
      _
    // Predicated region
    $region22: #{tpu_custom_call.1} parent=1 // pred_check
      _
    $region23: #{tpu_custom_call.1} parent=1 // pred_check_branch
      %30 = sbr.rel (0) target = $region25
    $region24: #{tpu_custom_call.1} parent=1 // pred_region
      _
    $region25: #{tpu_custom_call.1} parent=1 // pred_fallthru
      _
    // Predicated region
    $region26: #{tpu_custom_call.1} parent=1 // pred_check
      _
    $region27: #{tpu_custom_call.1} parent=1 // pred_check_branch
      %32 = sbr.rel (0) target = $region29
    $region28: #{tpu_custom_call.1} parent=1 // pred_region
      _
    $region29: #{tpu_custom_call.1} parent=1 // pred_fallthru
      _
    // Predicated region
    $region30: #{tpu_custom_call.1} parent=1 // pred_check
      _
    $region31: #{tpu_custom_call.1} parent=1 // pred_check_branch
      %34 = sbr.rel (0) target = $region33
    $region32: #{tpu_custom_call.1} parent=1 // pred_region
      _
    $region33: #{tpu_custom_call.1} parent=1 // pred_fallthru
      _
    // Predicated region
    $region34: #{tpu_custom_call.1} parent=1 // pred_check
      _
    $region35: #{tpu_custom_call.1} parent=1 // pred_check_branch
      %36 = sbr.rel (0) target = $region37
    $region36: #{tpu_custom_call.1} parent=1 // pred_region
      _
    $region37: #{tpu_custom_call.1} parent=1 // pred_fallthru
      _
    // Predicated region
    $region38: #{tpu_custom_call.1} parent=1 // pred_check
      _
    $region39: #{tpu_custom_call.1} parent=1 // pred_check_branch
      %38 = sbr.rel (0) target = $region41
    $region40: #{tpu_custom_call.1} parent=1 // pred_region
      _
    $region41: #{tpu_custom_call.1} parent=1 // pred_fallthru
      _
    // Predicated region
    $region42: #{tpu_custom_call.1} parent=1 // pred_check
      _
    $region43: #{tpu_custom_call.1} parent=1 // pred_check_branch
      %40 = sbr.rel (0) target = $region45
    $region44: #{tpu_custom_call.1} parent=1 // pred_region
      _
    $region45: #{tpu_custom_call.1} parent=1 // pred_fallthru
      _
    // Predicated region
    $region46: #{tpu_custom_call.1} parent=1 // pred_check
      _
    $region47: #{tpu_custom_call.1} parent=1 // pred_check_branch
      %42 = sbr.rel (0) target = $region49
    $region48: #{tpu_custom_call.1} parent=1 // pred_region
      _
    $region49: #{tpu_custom_call.1} parent=1 // pred_fallthru
      _
    // Predicated region
    $region50: #{tpu_custom_call.1} parent=1 // pred_check
      _
    $region51: #{tpu_custom_call.1} parent=1 // pred_check_branch
      %44 = sbr.rel (0) target = $region53
    $region52: #{tpu_custom_call.1} parent=1 // pred_region
      _
    $region53: #{tpu_custom_call.1} parent=1 // pred_fallthru
      _
    %v46 = vld [vmem:[%s0] sm:$0xff]
    %v47 = vld [vmem:[%s0 + $0x8] sm:$0xff]
    %v48 = vld [vmem:[%s0 + $0x10] sm:$0xff]
    %v49 = vld [vmem:[%s0 + $0x18] sm:$0xff]
    %v50 = vld [vmem:[%s0 + $0x20] sm:$0xff]
    %v51 = vld [vmem:[%s0 + $0x28] sm:$0xff]
    %v52 = vld [vmem:[%s0 + $0x30] sm:$0xff]
    %v53 = vld [vmem:[%s0 + $0x38] sm:$0xff]
    %v54 = vld [vmem:[%s0 + $0x40] sm:$0xff]
    %v55 = vld [vmem:[%s0 + $0x48] sm:$0xff]
    %v56 = vld [vmem:[%s0 + $0x50] sm:$0xff]
    %v57 = vld [vmem:[%s0 + $0x58] sm:$0xff]
    %v58 = vld [vmem:[%s0 + $0x60] sm:$0xff]
    %v59 = vld [vmem:[%s0 + $0x68] sm:$0xff]
    %v60 = vld [vmem:[%s0 + $0x70] sm:$0xff]
    %v61 = vld [vmem:[%s0 + $0x78] sm:$0xff]
    %v62 = vld [vmem:[%s0 + $0x80] sm:$0xff]
    %v63 = vld [vmem:[%s0 + $0x88] sm:$0xff]
    %v64 = vld [vmem:[%s0 + $0x90] sm:$0xff]
    %v65 = vld [vmem:[%s0 + $0x98] sm:$0xff]
    %v66 = vld [vmem:[%s0 + $0xa0] sm:$0xff]
    %v67 = vld [vmem:[%s0 + $0xa8] sm:$0xff]
    %v68 = vld [vmem:[%s0 + $0xb0] sm:$0xff]
    %v69 = vld [vmem:[%s0 + $0xb8] sm:$0xff]
    %v70 = vld [vmem:[%s0 + $0xc0] sm:$0xff]
    %v71 = vld [vmem:[%s0 + $0xc8] sm:$0xff]
    %v72 = vld [vmem:[%s0 + $0xd0] sm:$0xff]
    %v73 = vld [vmem:[%s0 + $0xd8] sm:$0xff]
    %v74 = vld [vmem:[%s0 + $0xe0] sm:$0x1f]
    %v75 = vld [vmem:[%s0 + $0xe8] sm:$0x1f]
    %v76 = vld [vmem:[%s0 + $0xf0] sm:$0x1f]
    %v77 = vld [vmem:[%s0 + $0xf8] sm:$0x1f]
    %v78 = vld [vmem:[%s0 + $0x100] sm:$0x1f]
    %v79 = vld [vmem:[%s0 + $0x108] sm:$0x1f]
    %v80 = vld [vmem:[%s0 + $0x110] sm:$0x1f]
    %v81 = vpack.c.bf16 %v53, %v46
    %v82 = vpack.c.bf16 %v54, %v47
    %v83 = vpack.c.bf16 %v55, %v48
    %v84 = vpack.c.bf16 %v56, %v49
    %v85 = vpack.c.bf16 %v57, %v50
    %v86 = vpack.c.bf16 %v58, %v51
    %v87 = vpack.c.bf16 %v59, %v52
    %v88 = vpack.c.bf16 %v67, %v60
    %v89 = vpack.c.bf16 %v68, %v61
    %v90 = vpack.c.bf16 %v69, %v62
    %v91 = vpack.c.bf16 %v70, %v63
    %v92 = vpack.c.bf16 %v71, %v64
    %v93 = vpack.c.bf16 %v72, %v65
    %v94 = vpack.c.bf16 %v73, %v66
    %v95 = vpack.c.bf16 %v74, %v74
    %v96 = vpack.c.bf16 %v75, %v75
    %v97 = vpack.c.bf16 %v76, %v76
    %v98 = vpack.c.bf16 %v77, %v77
    %v99 = vpack.c.bf16 %v78, %v78
    %v100 = vpack.c.bf16 %v79, %v79
    %v101 = vpack.c.bf16 %v80, %v80
    %v102 = vld [vmem:[%s1] sm:$0xff]
    %v103 = vld [vmem:[%s1 + $0x8] sm:$0xff]
    %v104 = vld [vmem:[%s1 + $0x10] sm:$0xff]
    %v105 = vld [vmem:[%s1 + $0x18] sm:$0xff]
    %v106 = vld [vmem:[%s1 + $0x20] sm:$0xff]
    %v107 = vld [vmem:[%s1 + $0x28] sm:$0xff]
    %v108 = vld [vmem:[%s1 + $0x30] sm:$0xff]
    %v109 = vld [vmem:[%s1 + $0x38] sm:$0xff]
    %v110 = vld [vmem:[%s1 + $0x40] sm:$0xff]
    %v111 = vld [vmem:[%s1 + $0x48] sm:$0xff]
    %v112 = vld [vmem:[%s1 + $0x50] sm:$0xff]
    %v113 = vld [vmem:[%s1 + $0x58] sm:$0xff]
    %v114 = vld [vmem:[%s1 + $0x60] sm:$0xff]
    %v115 = vld [vmem:[%s1 + $0x68] sm:$0xff]
    %v116 = vld [vmem:[%s1 + $0x70] sm:$0xff]
    %v117 = vld [vmem:[%s1 + $0x78] sm:$0xff]
    %v118 = vld [vmem:[%s1 + $0x80] sm:$0xff]
    %v119 = vld [vmem:[%s1 + $0x88] sm:$0xff]
    %v120 = vld [vmem:[%s1 + $0x90] sm:$0xff]
    %v121 = vld [vmem:[%s1 + $0x98] sm:$0xff]
    %v122 = vld [vmem:[%s1 + $0xa0] sm:$0xff]
    %v123 = vld [vmem:[%s1 + $0xa8] sm:$0xff]
    %v124 = vld [vmem:[%s1 + $0xb0] sm:$0xff]
    %v125 = vld [vmem:[%s1 + $0xb8] sm:$0xff]
    %v126 = vld [vmem:[%s1 + $0xc0] sm:$0xff]
    %v127 = vld [vmem:[%s1 + $0xc8] sm:$0xff]
    %v128 = vld [vmem:[%s1 + $0xd0] sm:$0xff]
    %v129 = vld [vmem:[%s1 + $0xd8] sm:$0xff]
    %v130 = vld [vmem:[%s1 + $0xe0] sm:$0xff]
    %v131 = vld [vmem:[%s1 + $0xe8] sm:$0xff]
    %v132 = vld [vmem:[%s1 + $0xf0] sm:$0xff]
    %v133 = vld [vmem:[%s1 + $0xf8] sm:$0xff]
    %v134 = vld [vmem:[%s1 + $0x100] sm:$0xff]
    %v135 = vld [vmem:[%s1 + $0x108] sm:$0xff]
    %v136 = vld [vmem:[%s1 + $0x110] sm:$0xff]
    %v137 = vld [vmem:[%s1 + $0x118] sm:$0xff]
    %v138 = vld [vmem:[%s1 + $0x120] sm:$0xff]
    %v139 = vld [vmem:[%s1 + $0x128] sm:$0xff]
    %v140 = vld [vmem:[%s1 + $0x130] sm:$0xff]
    %v141 = vld [vmem:[%s1 + $0x138] sm:$0xff]
    %v142 = vld [vmem:[%s1 + $0x140] sm:$0xff]
    %v143 = vld [vmem:[%s1 + $0x148] sm:$0xff]
    %v144 = vld [vmem:[%s1 + $0x150] sm:$0xff]
    %v145 = vld [vmem:[%s1 + $0x158] sm:$0xff]
    %v146 = vld [vmem:[%s1 + $0x160] sm:$0xff]
    %v147 = vld [vmem:[%s1 + $0x168] sm:$0xff]
    %v148 = vld [vmem:[%s1 + $0x170] sm:$0xff]
    %v149 = vld [vmem:[%s1 + $0x178] sm:$0xff]
    %v150 = vld [vmem:[%s1 + $0x180] sm:$0xff]
    %v151 = vld [vmem:[%s1 + $0x188] sm:$0xff]
    %v152 = vld [vmem:[%s1 + $0x190] sm:$0xff]
    %v153 = vld [vmem:[%s1 + $0x198] sm:$0xff]
    %v154 = vld [vmem:[%s1 + $0x1a0] sm:$0xff]
    %v155 = vld [vmem:[%s1 + $0x1a8] sm:$0xff]
    %v156 = vld [vmem:[%s1 + $0x1b0] sm:$0xff]
    %v157 = vld [vmem:[%s1 + $0x1b8] sm:$0xff]
    %v158 = vld [vmem:[%s1 + $0x1c0] sm:$0xff]
    %v159 = vld [vmem:[%s1 + $0x1c8] sm:$0xff]
    %v160 = vld [vmem:[%s1 + $0x1d0] sm:$0xff]
    %v161 = vld [vmem:[%s1 + $0x1d8] sm:$0xff]
    %v162 = vld [vmem:[%s1 + $0x1e0] sm:$0xff]
    %v163 = vld [vmem:[%s1 + $0x1e8] sm:$0xff]
    %v164 = vld [vmem:[%s1 + $0x1f0] sm:$0xff]
    %v165 = vld [vmem:[%s1 + $0x1f8] sm:$0xff]
    %v166 = vld [vmem:[%s1 + $0x200] sm:$0xff]
    %v167 = vld [vmem:[%s1 + $0x208] sm:$0xff]
    %v168 = vld [vmem:[%s1 + $0x210] sm:$0xff]
    %v169 = vld [vmem:[%s1 + $0x218] sm:$0xff]
    %v170 = vld [vmem:[%s1 + $0x220] sm:$0xff]
    %v171 = vld [vmem:[%s1 + $0x228] sm:$0xff]
    %v172 = vld [vmem:[%s1 + $0x230] sm:$0xff]
    %v173 = vld [vmem:[%s1 + $0x238] sm:$0xff]
    %v174 = vld [vmem:[%s1 + $0x240] sm:$0xff]
    %v175 = vld [vmem:[%s1 + $0x248] sm:$0xff]
    %v176 = vld [vmem:[%s1 + $0x250] sm:$0xff]
    %v177 = vld [vmem:[%s1 + $0x258] sm:$0xff]
    %v178 = vld [vmem:[%s1 + $0x260] sm:$0xff]
    %v179 = vld [vmem:[%s1 + $0x268] sm:$0xff]
    %v180 = vld [vmem:[%s1 + $0x270] sm:$0xff]
    %v181 = vld [vmem:[%s1 + $0x278] sm:$0xff]
    %v182 = vld [vmem:[%s1 + $0x280] sm:$0xff]
    %v183 = vld [vmem:[%s1 + $0x288] sm:$0xff]
    %v184 = vld [vmem:[%s1 + $0x290] sm:$0xff]
    %v185 = vld [vmem:[%s1 + $0x298] sm:$0xff]
    %v186 = vld [vmem:[%s1 + $0x2a0] sm:$0xff]
    %v187 = vld [vmem:[%s1 + $0x2a8] sm:$0xff]
    %v188 = vld [vmem:[%s1 + $0x2b0] sm:$0xff]
    %v189 = vld [vmem:[%s1 + $0x2b8] sm:$0xff]
    %v190 = vld [vmem:[%s1 + $0x2c0] sm:$0xff]
    %v191 = vld [vmem:[%s1 + $0x2c8] sm:$0xff]
    %v192 = vld [vmem:[%s1 + $0x2d0] sm:$0xff]
    %v193 = vld [vmem:[%s1 + $0x2d8] sm:$0xff]
    %v194 = vld [vmem:[%s1 + $0x2e0] sm:$0xff]
    %v195 = vld [vmem:[%s1 + $0x2e8] sm:$0xff]
    %v196 = vld [vmem:[%s1 + $0x2f0] sm:$0xff]
    %v197 = vld [vmem:[%s1 + $0x2f8] sm:$0xff]
    %v198 = vld [vmem:[%s1 + $0x300] sm:$0xff]
    %v199 = vld [vmem:[%s1 + $0x308] sm:$0xff]
    %v200 = vld [vmem:[%s2] sm:$0x3]
    %v202 = vlaneseq
    %v203 = vshrl.u32 %v202, 7
    %v204 = vsub.s32 0, %v203
    %v205 = vrot.slane %v200, %v204
    %v206 = vlaneseq
    %v207 = vshrl.u32 %v206, 7
    %v208 = vsub.s32 1, %v207
    %v209 = vrot.slane %v200, %v208
    %v310 = vunpack.c.l.b16 %v102
    %v311 = vunpack.c.h.b16 %v102
    %v312 = vunpack.c.l.b16 %v103
    %v313 = vunpack.c.h.b16 %v103
    %v314 = vunpack.c.l.b16 %v104
    %v315 = vunpack.c.h.b16 %v104
    %v316 = vunpack.c.l.b16 %v105
    %v317 = vunpack.c.h.b16 %v105
    %v318 = vunpack.c.l.b16 %v106
    %v319 = vunpack.c.h.b16 %v106
    %v320 = vunpack.c.l.b16 %v107
    %v321 = vunpack.c.h.b16 %v107
    %v322 = vunpack.c.l.b16 %v108
    %v323 = vunpack.c.h.b16 %v108
    %v324 = vunpack.c.l.b16 %v109
    %v325 = vunpack.c.h.b16 %v109
    %v326 = vunpack.c.l.b16 %v110
    %v327 = vunpack.c.h.b16 %v110
    %v328 = vunpack.c.l.b16 %v111
    %v329 = vunpack.c.h.b16 %v111
    %v330 = vunpack.c.l.b16 %v112
    %v331 = vunpack.c.h.b16 %v112
    %v332 = vunpack.c.l.b16 %v113
    %v333 = vunpack.c.h.b16 %v113
    %v334 = vunpack.c.l.b16 %v114
    %v335 = vunpack.c.h.b16 %v114
    %v336 = vunpack.c.l.b16 %v115
    %v337 = vunpack.c.h.b16 %v115
    %v338 = vunpack.c.l.b16 %v116
    %v339 = vunpack.c.h.b16 %v116
    %v340 = vunpack.c.l.b16 %v117
    %v341 = vunpack.c.h.b16 %v117
    %v342 = vunpack.c.l.b16 %v118
    %v343 = vunpack.c.h.b16 %v118
    %v344 = vunpack.c.l.b16 %v119
    %v345 = vunpack.c.h.b16 %v119
    %v346 = vunpack.c.l.b16 %v120
    %v347 = vunpack.c.h.b16 %v120
    %v348 = vunpack.c.l.b16 %v121
    %v349 = vunpack.c.h.b16 %v121
    %v350 = vunpack.c.l.b16 %v122
    %v351 = vunpack.c.h.b16 %v122
    %v352 = vunpack.c.l.b16 %v123
    %v353 = vunpack.c.h.b16 %v123
    %v354 = vunpack.c.l.b16 %v124
    %v355 = vunpack.c.h.b16 %v124
    %v356 = vunpack.c.l.b16 %v125
    %v357 = vunpack.c.h.b16 %v125
    %v358 = vunpack.c.l.b16 %v126
    %v359 = vunpack.c.h.b16 %v126
    %v360 = vunpack.c.l.b16 %v127
    %v361 = vunpack.c.h.b16 %v127
    %v362 = vunpack.c.l.b16 %v128
    %v363 = vunpack.c.h.b16 %v128
    %v364 = vunpack.c.l.b16 %v129
    %v365 = vunpack.c.h.b16 %v129
    %v366 = vunpack.c.l.b16 %v130
    %v367 = vunpack.c.h.b16 %v130
    %v368 = vunpack.c.l.b16 %v131
    %v369 = vunpack.c.h.b16 %v131
    %v370 = vunpack.c.l.b16 %v132
    %v371 = vunpack.c.h.b16 %v132
    %v372 = vunpack.c.l.b16 %v133
    %v373 = vunpack.c.h.b16 %v133
    %v374 = vunpack.c.l.b16 %v134
    %v375 = vunpack.c.h.b16 %v134
    %v376 = vunpack.c.l.b16 %v135
    %v377 = vunpack.c.h.b16 %v135
    %v378 = vunpack.c.l.b16 %v136
    %v379 = vunpack.c.h.b16 %v136
    %v380 = vunpack.c.l.b16 %v137
    %v381 = vunpack.c.h.b16 %v137
    %v382 = vunpack.c.l.b16 %v138
    %v383 = vunpack.c.h.b16 %v138
    %v384 = vunpack.c.l.b16 %v139
    %v385 = vunpack.c.h.b16 %v139
    %v386 = vunpack.c.l.b16 %v140
    %v387 = vunpack.c.h.b16 %v140
    %v388 = vunpack.c.l.b16 %v141
    %v389 = vunpack.c.h.b16 %v141
    %v390 = vunpack.c.l.b16 %v142
    %v391 = vunpack.c.h.b16 %v142
    %v392 = vunpack.c.l.b16 %v143
    %v393 = vunpack.c.h.b16 %v143
    %v394 = vunpack.c.l.b16 %v144
    %v395 = vunpack.c.h.b16 %v144
    %v396 = vunpack.c.l.b16 %v145
    %v397 = vunpack.c.h.b16 %v145
    %v398 = vunpack.c.l.b16 %v146
    %v399 = vunpack.c.h.b16 %v146
    %v400 = vunpack.c.l.b16 %v147
    %v401 = vunpack.c.h.b16 %v147
    %v402 = vunpack.c.l.b16 %v148
    %v403 = vunpack.c.h.b16 %v148
    %v404 = vunpack.c.l.b16 %v149
    %v405 = vunpack.c.h.b16 %v149
    %v406 = vunpack.c.l.b16 %v150
    %v407 = vunpack.c.h.b16 %v150
    %v408 = vunpack.c.l.b16 %v151
    %v409 = vunpack.c.h.b16 %v151
    %v410 = vunpack.c.l.b16 %v152
    %v411 = vunpack.c.h.b16 %v152
    %v412 = vunpack.c.l.b16 %v153
    %v413 = vunpack.c.h.b16 %v153
    %v414 = vunpack.c.l.b16 %v154
    %v415 = vunpack.c.h.b16 %v154
    %v416 = vunpack.c.l.b16 %v155
    %v417 = vunpack.c.h.b16 %v155
    %v418 = vunpack.c.l.b16 %v156
    %v419 = vunpack.c.h.b16 %v156
    %v420 = vunpack.c.l.b16 %v157
    %v421 = vunpack.c.h.b16 %v157
    %v422 = vunpack.c.l.b16 %v158
    %v423 = vunpack.c.h.b16 %v158
    %v424 = vunpack.c.l.b16 %v159
    %v425 = vunpack.c.h.b16 %v159
    %v426 = vunpack.c.l.b16 %v160
    %v427 = vunpack.c.h.b16 %v160
    %v428 = vunpack.c.l.b16 %v161
    %v429 = vunpack.c.h.b16 %v161
    %v430 = vunpack.c.l.b16 %v162
    %v431 = vunpack.c.h.b16 %v162
    %v432 = vunpack.c.l.b16 %v163
    %v433 = vunpack.c.h.b16 %v163
    %v434 = vunpack.c.l.b16 %v164
    %v435 = vunpack.c.h.b16 %v164
    %v436 = vunpack.c.l.b16 %v165
    %v437 = vunpack.c.h.b16 %v165
    %v438 = vunpack.c.l.b16 %v166
    %v439 = vunpack.c.h.b16 %v166
    %v440 = vunpack.c.l.b16 %v167
    %v441 = vunpack.c.h.b16 %v167
    %v442 = vunpack.c.l.b16 %v168
    %v443 = vunpack.c.h.b16 %v168
    %v444 = vunpack.c.l.b16 %v169
    %v445 = vunpack.c.h.b16 %v169
    %v446 = vunpack.c.l.b16 %v170
    %v447 = vunpack.c.h.b16 %v170
    %v448 = vunpack.c.l.b16 %v171
    %v449 = vunpack.c.h.b16 %v171
    %v450 = vunpack.c.l.b16 %v172
    %v451 = vunpack.c.h.b16 %v172
    %v452 = vunpack.c.l.b16 %v173
    %v453 = vunpack.c.h.b16 %v173
    %v454 = vunpack.c.l.b16 %v174
    %v455 = vunpack.c.h.b16 %v174
    %v456 = vunpack.c.l.b16 %v175
    %v457 = vunpack.c.h.b16 %v175
    %v458 = vunpack.c.l.b16 %v176
    %v459 = vunpack.c.h.b16 %v176
    %v460 = vunpack.c.l.b16 %v177
    %v461 = vunpack.c.h.b16 %v177
    %v462 = vunpack.c.l.b16 %v178
    %v463 = vunpack.c.h.b16 %v178
    %v464 = vunpack.c.l.b16 %v179
    %v465 = vunpack.c.h.b16 %v179
    %v466 = vunpack.c.l.b16 %v180
    %v467 = vunpack.c.h.b16 %v180
    %v468 = vunpack.c.l.b16 %v181
    %v469 = vunpack.c.h.b16 %v181
    %v470 = vunpack.c.l.b16 %v182
    %v471 = vunpack.c.h.b16 %v182
    %v472 = vunpack.c.l.b16 %v183
    %v473 = vunpack.c.h.b16 %v183
    %v474 = vunpack.c.l.b16 %v184
    %v475 = vunpack.c.h.b16 %v184
    %v476 = vunpack.c.l.b16 %v185
    %v477 = vunpack.c.h.b16 %v185
    %v478 = vunpack.c.l.b16 %v186
    %v479 = vunpack.c.h.b16 %v186
    %v480 = vunpack.c.l.b16 %v187
    %v481 = vunpack.c.h.b16 %v187
    %v482 = vunpack.c.l.b16 %v188
    %v483 = vunpack.c.h.b16 %v188
    %v484 = vunpack.c.l.b16 %v189
    %v485 = vunpack.c.h.b16 %v189
    %v486 = vunpack.c.l.b16 %v190
    %v487 = vunpack.c.h.b16 %v190
    %v488 = vunpack.c.l.b16 %v191
    %v489 = vunpack.c.h.b16 %v191
    %v490 = vunpack.c.l.b16 %v192
    %v491 = vunpack.c.h.b16 %v192
    %v492 = vunpack.c.l.b16 %v193
    %v493 = vunpack.c.h.b16 %v193
    %v494 = vunpack.c.l.b16 %v194
    %v495 = vunpack.c.h.b16 %v194
    %v496 = vunpack.c.l.b16 %v195
    %v497 = vunpack.c.h.b16 %v195
    %v498 = vunpack.c.l.b16 %v196
    %v499 = vunpack.c.h.b16 %v196
    %v500 = vunpack.c.l.b16 %v197
    %v501 = vunpack.c.h.b16 %v197
    %v502 = vunpack.c.l.b16 %v198
    %v503 = vunpack.c.h.b16 %v198
    %v504 = vunpack.c.l.b16 %v199
    %v505 = vunpack.c.h.b16 %v199
    %v506 = vpack.c.b16 %v312, %v310
    %v507 = vpack.c.b16 %v313, %v311
    %v508 = vpack.c.b16 %v316, %v314
    %v509 = vpack.c.b16 %v317, %v315
    %v510 = vpack.c.b16 %v320, %v318
    %v511 = vpack.c.b16 %v321, %v319
    %v512 = vpack.c.b16 %v324, %v322
    %v513 = vpack.c.b16 %v325, %v323
    %v514 = vpack.c.b16 %v328, %v326
    %v515 = vpack.c.b16 %v329, %v327
    %v516 = vpack.c.b16 %v332, %v330
    %v517 = vpack.c.b16 %v333, %v331
    %v518 = vpack.c.b16 %v336, %v334
    %v519 = vpack.c.b16 %v337, %v335
    %v520 = vpack.c.b16 %v340, %v338
    %v521 = vpack.c.b16 %v341, %v339
    %v522 = vpack.c.b16 %v344, %v342
    %v523 = vpack.c.b16 %v345, %v343
    %v524 = vpack.c.b16 %v348, %v346
    %v525 = vpack.c.b16 %v349, %v347
    %v526 = vpack.c.b16 %v352, %v350
    %v527 = vpack.c.b16 %v353, %v351
    %v528 = vpack.c.b16 %v356, %v354
    %v529 = vpack.c.b16 %v357, %v355
    %v530 = vpack.c.b16 %v360, %v358
    %v531 = vpack.c.b16 %v361, %v359
    %v532 = vpack.c.b16 %v364, %v362
    %v533 = vpack.c.b16 %v365, %v363
    %v534 = vpack.c.b16 %v368, %v366
    %v535 = vpack.c.b16 %v369, %v367
    %v536 = vpack.c.b16 %v372, %v370
    %v537 = vpack.c.b16 %v373, %v371
    %v538 = vpack.c.b16 %v376, %v374
    %v539 = vpack.c.b16 %v377, %v375
    %v540 = vpack.c.b16 %v380, %v378
    %v541 = vpack.c.b16 %v381, %v379
    %v542 = vpack.c.b16 %v384, %v382
    %v543 = vpack.c.b16 %v385, %v383
    %v544 = vpack.c.b16 %v388, %v386
    %v545 = vpack.c.b16 %v389, %v387
    %v546 = vpack.c.b16 %v392, %v390
    %v547 = vpack.c.b16 %v393, %v391
    %v548 = vpack.c.b16 %v396, %v394
    %v549 = vpack.c.b16 %v397, %v395
    %v550 = vpack.c.b16 %v400, %v398
    %v551 = vpack.c.b16 %v401, %v399
    %v552 = vpack.c.b16 %v404, %v402
    %v553 = vpack.c.b16 %v405, %v403
    %v554 = vpack.c.b16 %v408, %v406
    %v555 = vpack.c.b16 %v409, %v407
    %v556 = vpack.c.b16 %v412, %v410
    %v557 = vpack.c.b16 %v413, %v411
    %v558 = vpack.c.b16 %v416, %v414
    %v559 = vpack.c.b16 %v417, %v415
    %v560 = vpack.c.b16 %v420, %v418
    %v561 = vpack.c.b16 %v421, %v419
    %v562 = vpack.c.b16 %v424, %v422
    %v563 = vpack.c.b16 %v425, %v423
    %v564 = vpack.c.b16 %v428, %v426
    %v565 = vpack.c.b16 %v429, %v427
    %v566 = vpack.c.b16 %v432, %v430
    %v567 = vpack.c.b16 %v433, %v431
    %v568 = vpack.c.b16 %v436, %v434
    %v569 = vpack.c.b16 %v437, %v435
    %v570 = vpack.c.b16 %v440, %v438
    %v571 = vpack.c.b16 %v441, %v439
    %v572 = vpack.c.b16 %v444, %v442
    %v573 = vpack.c.b16 %v445, %v443
    %v574 = vpack.c.b16 %v448, %v446
    %v575 = vpack.c.b16 %v449, %v447
    %v576 = vpack.c.b16 %v452, %v450
    %v577 = vpack.c.b16 %v453, %v451
    %v578 = vpack.c.b16 %v456, %v454
    %v579 = vpack.c.b16 %v457, %v455
    %v580 = vpack.c.b16 %v460, %v458
    %v581 = vpack.c.b16 %v461, %v459
    %v582 = vpack.c.b16 %v464, %v462
    %v583 = vpack.c.b16 %v465, %v463
    %v584 = vpack.c.b16 %v468, %v466
    %v585 = vpack.c.b16 %v469, %v467
    %v586 = vpack.c.b16 %v472, %v470
    %v587 = vpack.c.b16 %v473, %v471
    %v588 = vpack.c.b16 %v476, %v474
    %v589 = vpack.c.b16 %v477, %v475
    %v590 = vpack.c.b16 %v480, %v478
    %v591 = vpack.c.b16 %v481, %v479
    %v592 = vpack.c.b16 %v484, %v482
    %v593 = vpack.c.b16 %v485, %v483
    %v594 = vpack.c.b16 %v488, %v486
    %v595 = vpack.c.b16 %v489, %v487
    %v596 = vpack.c.b16 %v492, %v490
    %v597 = vpack.c.b16 %v493, %v491
    %v598 = vpack.c.b16 %v496, %v494
    %v599 = vpack.c.b16 %v497, %v495
    %v600 = vpack.c.b16 %v500, %v498
    %v601 = vpack.c.b16 %v501, %v499
    %v602 = vpack.c.b16 %v504, %v502
    %v603 = vpack.c.b16 %v505, %v503
    %vm702 = vcmask 130048
    %v704 = vsel %vm702, %v87, 0
    %v707 = vsel %vm702, %v94, 0
    %v710 = vsel %vm702, %v101, 0
    %712 = vmatprep.subr.bf16.mxu0 %v507
    %713 = vmatpush1.bf16.msra.mxu0 %v506
    %714 = vmatprep.subr.bf16.mxu0 %v509
    %715 = vmatpush1.bf16.msra.mxu0 %v508
    %716 = vmatprep.subr.bf16.mxu0 %v511
    %717 = vmatpush1.bf16.msra.mxu0 %v510
    %718 = vmatprep.subr.bf16.mxu0 %v513
    %719 = vmatpush1.bf16.msra.mxu0 %v512
    %720 = vmatprep.subr.bf16.mxu0 %v515
    %721 = vmatpush1.bf16.msra.mxu0 %v514
    %722 = vmatprep.subr.bf16.mxu0 %v517
    %723 = vmatpush1.bf16.msra.mxu0 %v516
    %724 = vmatprep.subr.bf16.mxu0 %v519
    %725 = vmatpush1.bf16.msra.mxu0 %v518
    %726 = vmatprep.subr.bf16.mxu0 %v521
    %727 = vmatpush1.bf16.msra.mxu0 %v520
    %728 = vmatprep.subr.bf16.mxu0 %v523
    %729 = vmatpush1.bf16.msra.mxu0 %v522
    %730 = vmatprep.subr.bf16.mxu0 %v525
    %731 = vmatpush1.bf16.msra.mxu0 %v524
    %732 = vmatprep.subr.bf16.mxu0 %v527
    %733 = vmatpush1.bf16.msra.mxu0 %v526
    %734 = vmatprep.subr.bf16.mxu0 %v529
    %735 = vmatpush1.bf16.msra.mxu0 %v528
    %736 = vmatprep.subr.bf16.mxu0 %v531
    %737 = vmatpush1.bf16.msra.mxu0 %v530
    %738 = vmatprep.subr.bf16.mxu0 %v533
    %739 = vmatpush1.bf16.msra.mxu0 %v532
    %740 = vmatprep.subr.bf16.mxu0 %v535
    %741 = vmatpush1.bf16.msra.mxu0 %v534
    %742 = vmatprep.subr.bf16.mxu0 %v537
    %743 = vmatpush1.bf16.msra.mxu0 %v536
    %744 = vmatprep.mubr.bf16.mxu0 %v82
    %745 = vmatmul.mubr.bf16.gmra.mrb[0].mxu0 %v81
    %v746 = vpop.f32.mrb[0].mxu0
    %v747 = vadd.f32 %v205, %v746
    %v748 = vpop.f32.mrb[0].mxu0
    %v749 = vadd.f32 %v209, %v748
    %v750 = vpop.f32.mrb[0].mxu0
    %v751 = vadd.f32 %v205, %v750
    %v752 = vpop.f32.mrb[0].mxu0
    %v753 = vadd.f32 %v209, %v752
    %754 = vmatprep.mubr.bf16.mxu0 %v89
    %755 = vmatmul.mubr.bf16.gmra.mrb[0].mxu0 %v88
    %v756 = vpop.f32.mrb[0].mxu0
    %v757 = vadd.f32 %v205, %v756
    %v758 = vpop.f32.mrb[0].mxu0
    %v759 = vadd.f32 %v209, %v758
    %v760 = vpop.f32.mrb[0].mxu0
    %v761 = vadd.f32 %v205, %v760
    %v762 = vpop.f32.mrb[0].mxu0
    %v763 = vadd.f32 %v209, %v762
    %764 = vmatprep.mubr.bf16.mxu0 %v96
    %765 = vmatmul.mubr.bf16.gmra.mrb[0].mxu0 %v95
    %v766 = vpop.f32.mrb[0].mxu0
    %v767 = vadd.f32 %v205, %v766
    %v768 = vpop.f32.mrb[0].mxu0
    %v769 = vadd.f32 %v209, %v768
    %v770 = vpop.f32.mrb[0].mxu0
    %v771 = vpop.f32.mrb[0].mxu0
    %772 = vdwg.mxu0
    %773 = vmatprep.subr.bf16.mxu0 %v539
    %774 = vmatpush1.bf16.msra.mxu0 %v538
    %775 = vmatprep.subr.bf16.mxu0 %v541
    %776 = vmatpush1.bf16.msra.mxu0 %v540
    %777 = vmatprep.subr.bf16.mxu0 %v543
    %778 = vmatpush1.bf16.msra.mxu0 %v542
    %779 = vmatprep.subr.bf16.mxu0 %v545
    %780 = vmatpush1.bf16.msra.mxu0 %v544
    %781 = vmatprep.subr.bf16.mxu0 %v547
    %782 = vmatpush1.bf16.msra.mxu0 %v546
    %783 = vmatprep.subr.bf16.mxu0 %v549
    %784 = vmatpush1.bf16.msra.mxu0 %v548
    %785 = vmatprep.subr.bf16.mxu0 %v551
    %786 = vmatpush1.bf16.msra.mxu0 %v550
    %787 = vmatprep.subr.bf16.mxu0 %v553
    %788 = vmatpush1.bf16.msra.mxu0 %v552
    %789 = vmatprep.subr.bf16.mxu0 %v555
    %790 = vmatpush1.bf16.msra.mxu0 %v554
    %791 = vmatprep.subr.bf16.mxu0 %v557
    %792 = vmatpush1.bf16.msra.mxu0 %v556
    %793 = vmatprep.subr.bf16.mxu0 %v559
    %794 = vmatpush1.bf16.msra.mxu0 %v558
    %795 = vmatprep.subr.bf16.mxu0 %v561
    %796 = vmatpush1.bf16.msra.mxu0 %v560
    %797 = vmatprep.subr.bf16.mxu0 %v563
    %798 = vmatpush1.bf16.msra.mxu0 %v562
    %799 = vmatprep.subr.bf16.mxu0 %v565
    %800 = vmatpush1.bf16.msra.mxu0 %v564
    %801 = vmatprep.subr.bf16.mxu0 %v567
    %802 = vmatpush1.bf16.msra.mxu0 %v566
    %803 = vmatprep.subr.bf16.mxu0 %v569
    %804 = vmatpush1.bf16.msra.mxu0 %v568
    %805 = vmatprep.mubr.bf16.mxu0 %v84
    %806 = vmatmul.mubr.bf16.gmra.mrb[0].mxu0 %v83
    %v807 = vpop.f32.mrb[0].mxu0
    %v808 = vadd.f32 %v747, %v807
    %v809 = vpop.f32.mrb[0].mxu0
    %v810 = vadd.f32 %v749, %v809
    %v811 = vpop.f32.mrb[0].mxu0
    %v812 = vadd.f32 %v751, %v811
    %v813 = vpop.f32.mrb[0].mxu0
    %v814 = vadd.f32 %v753, %v813
    %815 = vmatprep.mubr.bf16.mxu0 %v91
    %816 = vmatmul.mubr.bf16.gmra.mrb[0].mxu0 %v90
    %v817 = vpop.f32.mrb[0].mxu0
    %v818 = vadd.f32 %v757, %v817
    %v819 = vpop.f32.mrb[0].mxu0
    %v820 = vadd.f32 %v759, %v819
    %v821 = vpop.f32.mrb[0].mxu0
    %v822 = vadd.f32 %v761, %v821
    %v823 = vpop.f32.mrb[0].mxu0
    %v824 = vadd.f32 %v763, %v823
    %825 = vmatprep.mubr.bf16.mxu0 %v98
    %826 = vmatmul.mubr.bf16.gmra.mrb[0].mxu0 %v97
    %v827 = vpop.f32.mrb[0].mxu0
    %v828 = vadd.f32 %v767, %v827
    %v829 = vpop.f32.mrb[0].mxu0
    %v830 = vadd.f32 %v769, %v829
    %v831 = vpop.f32.mrb[0].mxu0
    %v832 = vpop.f32.mrb[0].mxu0
    %833 = vdwg.mxu0
    %834 = vmatprep.subr.bf16.mxu0 %v571
    %835 = vmatpush1.bf16.msra.mxu0 %v570
    %836 = vmatprep.subr.bf16.mxu0 %v573
    %837 = vmatpush1.bf16.msra.mxu0 %v572
    %838 = vmatprep.subr.bf16.mxu0 %v575
    %839 = vmatpush1.bf16.msra.mxu0 %v574
    %840 = vmatprep.subr.bf16.mxu0 %v577
    %841 = vmatpush1.bf16.msra.mxu0 %v576
    %842 = vmatprep.subr.bf16.mxu0 %v579
    %843 = vmatpush1.bf16.msra.mxu0 %v578
    %844 = vmatprep.subr.bf16.mxu0 %v581
    %845 = vmatpush1.bf16.msra.mxu0 %v580
    %846 = vmatprep.subr.bf16.mxu0 %v583
    %847 = vmatpush1.bf16.msra.mxu0 %v582
    %848 = vmatprep.subr.bf16.mxu0 %v585
    %849 = vmatpush1.bf16.msra.mxu0 %v584
    %850 = vmatprep.subr.bf16.mxu0 %v587
    %851 = vmatpush1.bf16.msra.mxu0 %v586
    %852 = vmatprep.subr.bf16.mxu0 %v589
    %853 = vmatpush1.bf16.msra.mxu0 %v588
    %854 = vmatprep.subr.bf16.mxu0 %v591
    %855 = vmatpush1.bf16.msra.mxu0 %v590
    %856 = vmatprep.subr.bf16.mxu0 %v593
    %857 = vmatpush1.bf16.msra.mxu0 %v592
    %858 = vmatprep.subr.bf16.mxu0 %v595
    %859 = vmatpush1.bf16.msra.mxu0 %v594
    %860 = vmatprep.subr.bf16.mxu0 %v597
    %861 = vmatpush1.bf16.msra.mxu0 %v596
    %862 = vmatprep.subr.bf16.mxu0 %v599
    %863 = vmatpush1.bf16.msra.mxu0 %v598
    %864 = vmatprep.subr.bf16.mxu0 %v601
    %865 = vmatpush1.bf16.msra.mxu0 %v600
    %866 = vmatprep.mubr.bf16.mxu0 %v86
    %867 = vmatmul.mubr.bf16.gmra.mrb[0].mxu0 %v85
    %v868 = vpop.f32.mrb[0].mxu0
    %v869 = vadd.f32 %v808, %v868
    %v870 = vpop.f32.mrb[0].mxu0
    %v871 = vadd.f32 %v810, %v870
    %v872 = vpop.f32.mrb[0].mxu0
    %v873 = vadd.f32 %v812, %v872
    %v874 = vpop.f32.mrb[0].mxu0
    %v875 = vadd.f32 %v814, %v874
    %876 = vmatprep.mubr.bf16.mxu0 %v93
    %877 = vmatmul.mubr.bf16.gmra.mrb[0].mxu0 %v92
    %v878 = vpop.f32.mrb[0].mxu0
    %v879 = vadd.f32 %v818, %v878
    %v880 = vpop.f32.mrb[0].mxu0
    %v881 = vadd.f32 %v820, %v880
    %v882 = vpop.f32.mrb[0].mxu0
    %v883 = vadd.f32 %v822, %v882
    %v884 = vpop.f32.mrb[0].mxu0
    %v885 = vadd.f32 %v824, %v884
    %886 = vmatprep.mubr.bf16.mxu0 %v100
    %887 = vmatmul.mubr.bf16.gmra.mrb[0].mxu0 %v99
    %v888 = vpop.f32.mrb[0].mxu0
    %v889 = vadd.f32 %v828, %v888
    %v890 = vpop.f32.mrb[0].mxu0
    %v891 = vadd.f32 %v830, %v890
    %v892 = vpop.f32.mrb[0].mxu0
    %v893 = vpop.f32.mrb[0].mxu0
    %894 = vdwg.mxu0
    %895 = vmatprep.subr.bf16.mxu0 %v603
    %896 = vmatpush1.bf16.msra.mxu0 %v602
    %897 = vmatprep.subr.bf16.mxu0 0
    %898 = vmatpush1.bf16.msra.mxu0 0
    %899 = vmatprep.subr.bf16.mxu0 0
    %900 = vmatpush1.bf16.msra.mxu0 0
    %901 = vmatprep.subr.bf16.mxu0 0
    %902 = vmatpush1.bf16.msra.mxu0 0
    %903 = vmatprep.subr.bf16.mxu0 0
    %904 = vmatpush1.bf16.msra.mxu0 0
    %905 = vmatprep.subr.bf16.mxu0 0
    %906 = vmatpush1.bf16.msra.mxu0 0
    %907 = vmatprep.subr.bf16.mxu0 0
    %908 = vmatpush1.bf16.msra.mxu0 0
    %909 = vmatprep.subr.bf16.mxu0 0
    %910 = vmatpush1.bf16.msra.mxu0 0
    %911 = vmatprep.subr.bf16.mxu0 0
    %912 = vmatpush1.bf16.msra.mxu0 0
    %913 = vmatprep.subr.bf16.mxu0 0
    %914 = vmatpush1.bf16.msra.mxu0 0
    %915 = vmatprep.subr.bf16.mxu0 0
    %916 = vmatpush1.bf16.msra.mxu0 0
    %917 = vmatprep.subr.bf16.mxu0 0
    %918 = vmatpush1.bf16.msra.mxu0 0
    %919 = vmatprep.subr.bf16.mxu0 0
    %920 = vmatpush1.bf16.msra.mxu0 0
    %921 = vmatprep.subr.bf16.mxu0 0
    %922 = vmatpush1.bf16.msra.mxu0 0
    %923 = vmatprep.subr.bf16.mxu0 0
    %924 = vmatpush1.bf16.msra.mxu0 0
    %925 = vmatprep.subr.bf16.mxu0 0
    %926 = vmatpush1.bf16.msra.mxu0 0
    %927 = vmatprep.mubr.bf16.mxu0 0
    %928 = vmatmul.mubr.bf16.gmra.mrb[0].mxu0 %v704
    %v929 = vpop.f32.mrb[0].mxu0
    %v930 = vadd.f32 %v869, %v929
    %v931 = vpop.f32.mrb[0].mxu0
    %v932 = vadd.f32 %v871, %v931
    %v933 = vpop.f32.mrb[0].mxu0
    %v934 = vadd.f32 %v873, %v933
    %v935 = vpop.f32.mrb[0].mxu0
    %v936 = vadd.f32 %v875, %v935
    %937 = vmatprep.mubr.bf16.mxu0 0
    %938 = vmatmul.mubr.bf16.gmra.mrb[0].mxu0 %v707
    %v939 = vpop.f32.mrb[0].mxu0
    %v940 = vadd.f32 %v879, %v939
    %v941 = vpop.f32.mrb[0].mxu0
    %v942 = vadd.f32 %v881, %v941
    %v943 = vpop.f32.mrb[0].mxu0
    %v944 = vadd.f32 %v883, %v943
    %v945 = vpop.f32.mrb[0].mxu0
    %v946 = vadd.f32 %v885, %v945
    %947 = vmatprep.mubr.bf16.mxu0 0
    %948 = vmatmul.mubr.bf16.gmra.mrb[0].mxu0 %v710
    %v949 = vpop.f32.mrb[0].mxu0
    %v950 = vadd.f32 %v889, %v949
    %v951 = vpop.f32.mrb[0].mxu0
    %v952 = vadd.f32 %v891, %v951
    %v953 = vpop.f32.mrb[0].mxu0
    %v954 = vpop.f32.mrb[0].mxu0
    %955 = vdwg.mxu0
    %v956 = vmax.f32 %v930, 0.0
    %v957 = vmax.f32 %v932, 0.0
    %v958 = vmax.f32 %v934, 0.0
    %v959 = vmax.f32 %v936, 0.0
    %v960 = vmax.f32 %v940, 0.0
    %v961 = vmax.f32 %v942, 0.0
    %v962 = vmax.f32 %v944, 0.0
    %v963 = vmax.f32 %v946, 0.0
    %v964 = vmax.f32 %v950, 0.0
    %v965 = vmax.f32 %v952, 0.0
    %v966 = vpack.c.bf16 %v958, %v956
    %v967 = vpack.c.bf16 %v959, %v957
    %v968 = vpack.c.bf16 %v962, %v960
    %v969 = vpack.c.bf16 %v963, %v961
    %v970 = vpack.c.bf16 %v964, %v964
    %v971 = vpack.c.bf16 %v965, %v965
    %v972 = vld [vmem:[%s3] sm:$0xf]
    %v973 = vld [vmem:[%s3 + $0x4] sm:$0xf]
    %v974 = vld [vmem:[%s3 + $0x8] sm:$0xf]
    %v975 = vld [vmem:[%s3 + $0xc] sm:$0xf]
    %v976 = vld [vmem:[%s3 + $0x10] sm:$0xf]
    %v977 = vld [vmem:[%s3 + $0x14] sm:$0xf]
    %v978 = vld [vmem:[%s3 + $0x18] sm:$0xf]
    %v979 = vld [vmem:[%s3 + $0x1c] sm:$0xf]
    %v980 = vld [vmem:[%s3 + $0x20] sm:$0xf]
    %v981 = vld [vmem:[%s3 + $0x24] sm:$0xf]
    %v982 = vld [vmem:[%s3 + $0x28] sm:$0xf]
    %v983 = vld [vmem:[%s3 + $0x2c] sm:$0xf]
    %v984 = vld [vmem:[%s3 + $0x30] sm:$0xf]
    %v985 = vld [vmem:[%s3 + $0x34] sm:$0xf]
    %v986 = vld [vmem:[%s3 + $0x38] sm:$0xf]
    %v987 = vld [vmem:[%s3 + $0x3c] sm:$0xf]
    %v988 = vld [vmem:[%s3 + $0x40] sm:$0xf]
    %v989 = vld [vmem:[%s3 + $0x44] sm:$0xf]
    %v990 = vld [vmem:[%s3 + $0x48] sm:$0xf]
    %v991 = vld [vmem:[%s3 + $0x4c] sm:$0xf]
    %v992 = vld [vmem:[%s3 + $0x50] sm:$0xf]
    %v993 = vld [vmem:[%s3 + $0x54] sm:$0xf]
    %v994 = vld [vmem:[%s3 + $0x58] sm:$0xf]
    %v995 = vld [vmem:[%s3 + $0x5c] sm:$0xf]
    %v996 = vld [vmem:[%s3 + $0x60] sm:$0xf]
    %v997 = vld [vmem:[%s3 + $0x64] sm:$0xf]
    %v998 = vld [vmem:[%s3 + $0x68] sm:$0xf]
    %v999 = vld [vmem:[%s3 + $0x6c] sm:$0xf]
    %v1000 = vld [vmem:[%s3 + $0x70] sm:$0xf]
    %v1001 = vld [vmem:[%s3 + $0x74] sm:$0xf]
    %v1002 = vld [vmem:[%s3 + $0x78] sm:$0xf]
    %v1003 = vld [vmem:[%s3 + $0x7c] sm:$0xf]
    %v1004 = vld [vmem:[%s4] sm:$0x1]
    %v1006 = vlaneseq
    %v1007 = vshrl.u32 %v1006, 7
    %v1008 = vsub.s32 0, %v1007
    %v1009 = vrot.slane %v1004, %v1008
    %v1043 = vunpack.c.l.b16 %v972
    %v1044 = vunpack.c.l.b16 %v973
    %v1045 = vunpack.c.l.b16 %v974
    %v1046 = vunpack.c.l.b16 %v975
    %v1047 = vunpack.c.l.b16 %v976
    %v1048 = vunpack.c.l.b16 %v977
    %v1049 = vunpack.c.l.b16 %v978
    %v1050 = vunpack.c.l.b16 %v979
    %v1051 = vunpack.c.l.b16 %v980
    %v1052 = vunpack.c.l.b16 %v981
    %v1053 = vunpack.c.l.b16 %v982
    %v1054 = vunpack.c.l.b16 %v983
    %v1055 = vunpack.c.l.b16 %v984
    %v1056 = vunpack.c.l.b16 %v985
    %v1057 = vunpack.c.l.b16 %v986
    %v1058 = vunpack.c.l.b16 %v987
    %v1059 = vunpack.c.l.b16 %v988
    %v1060 = vunpack.c.l.b16 %v989
    %v1061 = vunpack.c.l.b16 %v990
    %v1062 = vunpack.c.l.b16 %v991
    %v1063 = vunpack.c.l.b16 %v992
    %v1064 = vunpack.c.l.b16 %v993
    %v1065 = vunpack.c.l.b16 %v994
    %v1066 = vunpack.c.l.b16 %v995
    %v1067 = vunpack.c.l.b16 %v996
    %v1068 = vunpack.c.l.b16 %v997
    %v1069 = vunpack.c.l.b16 %v998
    %v1070 = vunpack.c.l.b16 %v999
    %v1071 = vunpack.c.l.b16 %v1000
    %v1072 = vunpack.c.l.b16 %v1001
    %v1073 = vunpack.c.l.b16 %v1002
    %v1074 = vunpack.c.l.b16 %v1003
    %v1075 = vpack.c.b16 %v1044, %v1043
    %v1076 = vpack.c.b16 %v1046, %v1045
    %v1077 = vpack.c.b16 %v1048, %v1047
    %v1078 = vpack.c.b16 %v1050, %v1049
    %v1079 = vpack.c.b16 %v1052, %v1051
    %v1080 = vpack.c.b16 %v1054, %v1053
    %v1081 = vpack.c.b16 %v1056, %v1055
    %v1082 = vpack.c.b16 %v1058, %v1057
    %v1083 = vpack.c.b16 %v1060, %v1059
    %v1084 = vpack.c.b16 %v1062, %v1061
    %v1085 = vpack.c.b16 %v1064, %v1063
    %v1086 = vpack.c.b16 %v1066, %v1065
    %v1087 = vpack.c.b16 %v1068, %v1067
    %v1088 = vpack.c.b16 %v1070, %v1069
    %v1089 = vpack.c.b16 %v1072, %v1071
    %v1090 = vpack.c.b16 %v1074, %v1073
    %1107 = vmatprep.subr.bf16.mxu0 0
    %1108 = vmatpush1.bf16.msra.mxu0 %v1075
    %1109 = vmatprep.subr.bf16.mxu0 0
    %1110 = vmatpush1.bf16.msra.mxu0 %v1076
    %1111 = vmatprep.subr.bf16.mxu0 0
    %1112 = vmatpush1.bf16.msra.mxu0 %v1077
    %1113 = vmatprep.subr.bf16.mxu0 0
    %1114 = vmatpush1.bf16.msra.mxu0 %v1078
    %1115 = vmatprep.subr.bf16.mxu0 0
    %1116 = vmatpush1.bf16.msra.mxu0 %v1079
    %1117 = vmatprep.subr.bf16.mxu0 0
    %1118 = vmatpush1.bf16.msra.mxu0 %v1080
    %1119 = vmatprep.subr.bf16.mxu0 0
    %1120 = vmatpush1.bf16.msra.mxu0 %v1081
    %1121 = vmatprep.subr.bf16.mxu0 0
    %1122 = vmatpush1.bf16.msra.mxu0 %v1082
    %1123 = vmatprep.subr.bf16.mxu0 0
    %1124 = vmatpush1.bf16.msra.mxu0 %v1083
    %1125 = vmatprep.subr.bf16.mxu0 0
    %1126 = vmatpush1.bf16.msra.mxu0 %v1084
    %1127 = vmatprep.subr.bf16.mxu0 0
    %1128 = vmatpush1.bf16.msra.mxu0 %v1085
    %1129 = vmatprep.subr.bf16.mxu0 0
    %1130 = vmatpush1.bf16.msra.mxu0 %v1086
    %1131 = vmatprep.subr.bf16.mxu0 0
    %1132 = vmatpush1.bf16.msra.mxu0 %v1087
    %1133 = vmatprep.subr.bf16.mxu0 0
    %1134 = vmatpush1.bf16.msra.mxu0 %v1088
    %1135 = vmatprep.subr.bf16.mxu0 0
    %1136 = vmatpush1.bf16.msra.mxu0 %v1089
    %1137 = vmatprep.subr.bf16.mxu0 0
    %1138 = vmatpush1.bf16.msra.mxu0 %v1090
    %1139 = vmatprep.mubr.bf16.mxu0 %v967
    %1140 = vmatmul.mubr.bf16.gmra.mrb[0].mxu0 %v966
    %v1141 = vpop.f32.mrb[0].mxu0
    %v1142 = vadd.f32 %v1009, %v1141
    %v1143 = vpop.f32.mrb[0].mxu0
    %v1144 = vpop.f32.mrb[0].mxu0
    %v1145 = vadd.f32 %v1009, %v1144
    %v1146 = vpop.f32.mrb[0].mxu0
    %1147 = vmatprep.mubr.bf16.mxu0 %v969
    %1148 = vmatmul.mubr.bf16.gmra.mrb[0].mxu0 %v968
    %v1149 = vpop.f32.mrb[0].mxu0
    %v1150 = vadd.f32 %v1009, %v1149
    %v1151 = vpop.f32.mrb[0].mxu0
    %v1152 = vpop.f32.mrb[0].mxu0
    %v1153 = vadd.f32 %v1009, %v1152
    %v1154 = vpop.f32.mrb[0].mxu0
    %1155 = vmatprep.mubr.bf16.mxu0 %v971
    %1156 = vmatmul.mubr.bf16.gmra.mrb[0].mxu0 %v970
    %v1157 = vpop.f32.mrb[0].mxu0
    %v1158 = vadd.f32 %v1009, %v1157
    %v1159 = vpop.f32.mrb[0].mxu0
    %v1160 = vpop.f32.mrb[0].mxu0
    %v1161 = vpop.f32.mrb[0].mxu0
    %1162 = vdwg.mxu0
    %v1163 = vmax.f32 %v1142, 0.0
    %v1164 = vmax.f32 %v1145, 0.0
    %v1165 = vmax.f32 %v1150, 0.0
    %v1166 = vmax.f32 %v1153, 0.0
    %v1167 = vmax.f32 %v1158, 0.0
    %v1168 = vpack.c.bf16 %v1164, %v1163
    %v1169 = vpack.c.bf16 %v1166, %v1165
    %v1170 = vpack.c.bf16 %v1167, %v1167
    %v1171 = vld [vmem:[%s5] sm:$0xf]
    %v1172 = vld [vmem:[%s5 + $0x4] sm:$0xf]
    %v1173 = vld [vmem:[%s5 + $0x8] sm:$0xf]
    %v1174 = vld [vmem:[%s5 + $0xc] sm:$0xf]
    %v1175 = vld [vmem:[%s5 + $0x10] sm:$0xf]
    %v1176 = vld [vmem:[%s5 + $0x14] sm:$0xf]
    %v1177 = vld [vmem:[%s5 + $0x18] sm:$0xf]
    %v1178 = vld [vmem:[%s5 + $0x1c] sm:$0xf]
    %v1179 = vld [vmem:[%s5 + $0x20] sm:$0xf]
    %v1180 = vld [vmem:[%s5 + $0x24] sm:$0xf]
    %v1181 = vld [vmem:[%s5 + $0x28] sm:$0xf]
    %v1182 = vld [vmem:[%s5 + $0x2c] sm:$0xf]
    %v1183 = vld [vmem:[%s5 + $0x30] sm:$0xf]
    %v1184 = vld [vmem:[%s5 + $0x34] sm:$0xf]
    %v1185 = vld [vmem:[%s5 + $0x38] sm:$0xf]
    %v1186 = vld [vmem:[%s5 + $0x3c] sm:$0xf]
    %v1187 = vld [vmem:[%s6] sm:$0x1]
    %v1189 = vlaneseq
    %v1190 = vshrl.u32 %v1189, 7
    %v1191 = vsub.s32 0, %v1190
    %v1192 = vrot.slane %v1187, %v1191
    %v1210 = vunpack.c.l.b16 %v1171
    %v1211 = vunpack.c.l.b16 %v1172
    %v1212 = vunpack.c.l.b16 %v1173
    %v1213 = vunpack.c.l.b16 %v1174
    %v1214 = vunpack.c.l.b16 %v1175
    %v1215 = vunpack.c.l.b16 %v1176
    %v1216 = vunpack.c.l.b16 %v1177
    %v1217 = vunpack.c.l.b16 %v1178
    %v1218 = vunpack.c.l.b16 %v1179
    %v1219 = vunpack.c.l.b16 %v1180
    %v1220 = vunpack.c.l.b16 %v1181
    %v1221 = vunpack.c.l.b16 %v1182
    %v1222 = vunpack.c.l.b16 %v1183
    %v1223 = vunpack.c.l.b16 %v1184
    %v1224 = vunpack.c.l.b16 %v1185
    %v1225 = vunpack.c.l.b16 %v1186
    %v1226 = vpack.c.b16 %v1211, %v1210
    %v1227 = vpack.c.b16 %v1213, %v1212
    %v1228 = vpack.c.b16 %v1215, %v1214
    %v1229 = vpack.c.b16 %v1217, %v1216
    %v1230 = vpack.c.b16 %v1219, %v1218
    %v1231 = vpack.c.b16 %v1221, %v1220
    %v1232 = vpack.c.b16 %v1223, %v1222
    %v1233 = vpack.c.b16 %v1225, %v1224
    %1242 = vmatprep.subr.bf16.mxu0 0
    %1243 = vmatpush1.bf16.msra.mxu0 %v1226
    %1244 = vmatprep.subr.bf16.mxu0 0
    %1245 = vmatpush1.bf16.msra.mxu0 %v1227
    %1246 = vmatprep.subr.bf16.mxu0 0
    %1247 = vmatpush1.bf16.msra.mxu0 %v1228
    %1248 = vmatprep.subr.bf16.mxu0 0
    %1249 = vmatpush1.bf16.msra.mxu0 %v1229
    %1250 = vmatprep.subr.bf16.mxu0 0
    %1251 = vmatpush1.bf16.msra.mxu0 %v1230
    %1252 = vmatprep.subr.bf16.mxu0 0
    %1253 = vmatpush1.bf16.msra.mxu0 %v1231
    %1254 = vmatprep.subr.bf16.mxu0 0
    %1255 = vmatpush1.bf16.msra.mxu0 %v1232
    %1256 = vmatprep.subr.bf16.mxu0 0
    %1257 = vmatpush1.bf16.msra.mxu0 %v1233
    %1258 = vmatprep.subr.bf16.mxu0 0
    %1259 = vmatpush1.bf16.msra.mxu0 0
    %1260 = vmatprep.subr.bf16.mxu0 0
    %1261 = vmatpush1.bf16.msra.mxu0 0
    %1262 = vmatprep.subr.bf16.mxu0 0
    %1263 = vmatpush1.bf16.msra.mxu0 0
    %1264 = vmatprep.subr.bf16.mxu0 0
    %1265 = vmatpush1.bf16.msra.mxu0 0
    %1266 = vmatprep.subr.bf16.mxu0 0
    %1267 = vmatpush1.bf16.msra.mxu0 0
    %1268 = vmatprep.subr.bf16.mxu0 0
    %1269 = vmatpush1.bf16.msra.mxu0 0
    %1270 = vmatprep.subr.bf16.mxu0 0
    %1271 = vmatpush1.bf16.msra.mxu0 0
    %1272 = vmatprep.subr.bf16.mxu0 0
    %1273 = vmatpush1.bf16.msra.mxu0 0
    %1274 = vmatprep.mubr.bf16.mxu0 0
    %1275 = vmatmul.mubr.bf16.gmra.mrb[0].mxu0 %v1168
    %v1276 = vpop.f32.mrb[0].mxu0
    %v1277 = vadd.f32 %v1192, %v1276
    %v1278 = vpop.f32.mrb[0].mxu0
    %v1279 = vpop.f32.mrb[0].mxu0
    %v1280 = vadd.f32 %v1192, %v1279
    %v1281 = vpop.f32.mrb[0].mxu0
    %1282 = vmatprep.mubr.bf16.mxu0 0
    %1283 = vmatmul.mubr.bf16.gmra.mrb[0].mxu0 %v1169
    %v1284 = vpop.f32.mrb[0].mxu0
    %v1285 = vadd.f32 %v1192, %v1284
    %v1286 = vpop.f32.mrb[0].mxu0
    %v1287 = vpop.f32.mrb[0].mxu0
    %v1288 = vadd.f32 %v1192, %v1287
    %v1289 = vpop.f32.mrb[0].mxu0
    %1290 = vmatprep.mubr.bf16.mxu0 0
    %1291 = vmatmul.mubr.bf16.gmra.mrb[0].mxu0 %v1170
    %v1292 = vpop.f32.mrb[0].mxu0
    %v1293 = vadd.f32 %v1192, %v1292
    %v1294 = vpop.f32.mrb[0].mxu0
    %v1295 = vpop.f32.mrb[0].mxu0
    %v1296 = vpop.f32.mrb[0].mxu0
    %1297 = vdwg.mxu0
    %v1298 = vmax.f32 %v1277, 0.0
    %v1299 = vmax.f32 %v1280, 0.0
    %v1300 = vmax.f32 %v1285, 0.0
    %v1301 = vmax.f32 %v1288, 0.0
    %v1302 = vmax.f32 %v1293, 0.0
    %v1303 = vld [vmem:[%s7] sm:$0x3]
    %1305 = vset.pattern.permute.xlu0 0
    %1306 = vperm.xlu0 %1305, %v1298
    %v1307 = vpop.permute.xlu0 %1306
    %1310 = vset.pattern.permute.xlu0 0
    %1311 = vperm.xlu0 %1310, %v1299
    %v1312 = vpop.permute.xlu0 %1311
    %1315 = vset.pattern.permute.xlu0 0
    %1316 = vperm.xlu0 %1315, %v1300
    %v1317 = vpop.permute.xlu0 %1316
    %1320 = vset.pattern.permute.xlu0 0
    %1321 = vperm.xlu0 %1320, %v1301
    %v1322 = vpop.permute.xlu0 %1321
    %1325 = vset.pattern.permute.xlu0 0
    %1326 = vperm.xlu0 %1325, %v1302
    %v1327 = vpop.permute.xlu0 %1326
    %v1329 = vlaneseq
    %v1330 = vshrl.u32 %v1329, 7
    %v1331 = vsub.s32 0, %v1330
    %v1332 = vrot.slane %v1303, %v1331
    %v1333 = vmul.f32 %v1307, %v1332
    %v1334 = vmul.f32 %v1312, %v1332
    %v1335 = vmul.f32 %v1317, %v1332
    %v1336 = vmul.f32 %v1322, %v1332
    %v1337 = vmul.f32 %v1327, %v1332
    %1338 = vset.pattern.permute.xlu0 1
    %1339 = vperm.xlu0 %1338, %v1298
    %v1340 = vpop.permute.xlu0 %1339
    %1342 = vset.pattern.permute.xlu0 1
    %1343 = vperm.xlu0 %1342, %v1299
    %v1344 = vpop.permute.xlu0 %1343
    %1346 = vset.pattern.permute.xlu0 1
    %1347 = vperm.xlu0 %1346, %v1300
    %v1348 = vpop.permute.xlu0 %1347
    %1350 = vset.pattern.permute.xlu0 1
    %1351 = vperm.xlu0 %1350, %v1301
    %v1352 = vpop.permute.xlu0 %1351
    %1354 = vset.pattern.permute.xlu0 1
    %1355 = vperm.xlu0 %1354, %v1302
    %v1356 = vpop.permute.xlu0 %1355
    %v1358 = vlaneseq
    %v1359 = vshrl.u32 %v1358, 7
    %v1360 = vsub.s32 1, %v1359
    %v1361 = vrot.slane %v1303, %v1360
    %v1362 = vmul.f32 %v1340, %v1361
    %v1363 = vmul.f32 %v1344, %v1361
    %v1364 = vmul.f32 %v1348, %v1361
    %v1365 = vmul.f32 %v1352, %v1361
    %v1366 = vmul.f32 %v1356, %v1361
    %v1367 = vadd.f32 %v1333, %v1362
    %v1368 = vadd.f32 %v1334, %v1363
    %v1369 = vadd.f32 %v1335, %v1364
    %v1370 = vadd.f32 %v1336, %v1365
    %v1371 = vadd.f32 %v1337, %v1366
    %v1372 = vld [vmem:[%s8] sm:$0x1]
    %v1374 = vlaneseq
    %v1375 = vshrl.u32 %v1374, 7
    %v1376 = vsub.s32 0, %v1375
    %v1377 = vrot.slane %v1372, %v1376
    %v1379 = vadd.f32 %v1367, %v1377
    %v1380 = vadd.f32 %v1368, %v1377
    %v1381 = vadd.f32 %v1369, %v1377
    %v1382 = vadd.f32 %v1370, %v1377
    %v1383 = vadd.f32 %v1371, %v1377
    %v1384 = vmax.f32 %v1379, 0.0
    %v1385 = vmax.f32 %v1380, 0.0
    %v1386 = vmax.f32 %v1381, 0.0
    %v1387 = vmax.f32 %v1382, 0.0
    %v1388 = vmax.f32 %v1383, 0.0
    %v1389 = vpack.c.bf16 %v1385, %v1384
    %v1390 = vpack.c.bf16 %v1387, %v1386
    %v1391 = vpack.c.bf16 %v1388, %v1388
    %v1392 = vld [vmem:[%s9] sm:$0xff]
    %v1393 = vld [vmem:[%s9 + $0x8] sm:$0xff]
    %v1394 = vld [vmem:[%s9 + $0x10] sm:$0xff]
    %v1395 = vld [vmem:[%s9 + $0x18] sm:$0xff]
    %v1396 = vld [vmem:[%s9 + $0x20] sm:$0xff]
    %v1397 = vld [vmem:[%s9 + $0x28] sm:$0xff]
    %v1398 = vld [vmem:[%s9 + $0x30] sm:$0xff]
    %v1399 = vld [vmem:[%s9 + $0x38] sm:$0xff]
    %v1400 = vld [vmem:[%s9 + $0x40] sm:$0xff]
    %v1401 = vld [vmem:[%s9 + $0x48] sm:$0xff]
    %v1402 = vld [vmem:[%s9 + $0x50] sm:$0xff]
    %v1403 = vld [vmem:[%s9 + $0x58] sm:$0xff]
    %v1404 = vld [vmem:[%s9 + $0x60] sm:$0xff]
    %v1405 = vld [vmem:[%s9 + $0x68] sm:$0xff]
    %v1406 = vld [vmem:[%s9 + $0x70] sm:$0xff]
    %v1407 = vld [vmem:[%s9 + $0x78] sm:$0xff]
    %v1408 = vld [vmem:[%s10] sm:$0x3]
    %v1410 = vlaneseq
    %v1411 = vshrl.u32 %v1410, 7
    %v1412 = vsub.s32 0, %v1411
    %v1413 = vrot.slane %v1408, %v1412
    %v1414 = vlaneseq
    %v1415 = vshrl.u32 %v1414, 7
    %v1416 = vsub.s32 1, %v1415
    %v1417 = vrot.slane %v1408, %v1416
    %v1436 = vunpack.c.l.b16 %v1392
    %v1437 = vunpack.c.h.b16 %v1392
    %v1438 = vunpack.c.l.b16 %v1393
    %v1439 = vunpack.c.h.b16 %v1393
    %v1440 = vunpack.c.l.b16 %v1394
    %v1441 = vunpack.c.h.b16 %v1394
    %v1442 = vunpack.c.l.b16 %v1395
    %v1443 = vunpack.c.h.b16 %v1395
    %v1444 = vunpack.c.l.b16 %v1396
    %v1445 = vunpack.c.h.b16 %v1396
    %v1446 = vunpack.c.l.b16 %v1397
    %v1447 = vunpack.c.h.b16 %v1397
    %v1448 = vunpack.c.l.b16 %v1398
    %v1449 = vunpack.c.h.b16 %v1398
    %v1450 = vunpack.c.l.b16 %v1399
    %v1451 = vunpack.c.h.b16 %v1399
    %v1452 = vunpack.c.l.b16 %v1400
    %v1453 = vunpack.c.h.b16 %v1400
    %v1454 = vunpack.c.l.b16 %v1401
    %v1455 = vunpack.c.h.b16 %v1401
    %v1456 = vunpack.c.l.b16 %v1402
    %v1457 = vunpack.c.h.b16 %v1402
    %v1458 = vunpack.c.l.b16 %v1403
    %v1459 = vunpack.c.h.b16 %v1403
    %v1460 = vunpack.c.l.b16 %v1404
    %v1461 = vunpack.c.h.b16 %v1404
    %v1462 = vunpack.c.l.b16 %v1405
    %v1463 = vunpack.c.h.b16 %v1405
    %v1464 = vunpack.c.l.b16 %v1406
    %v1465 = vunpack.c.h.b16 %v1406
    %v1466 = vunpack.c.l.b16 %v1407
    %v1467 = vunpack.c.h.b16 %v1407
    %v1468 = vpack.c.b16 %v1438, %v1436
    %v1469 = vpack.c.b16 %v1439, %v1437
    %v1470 = vpack.c.b16 %v1442, %v1440
    %v1471 = vpack.c.b16 %v1443, %v1441
    %v1472 = vpack.c.b16 %v1446, %v1444
    %v1473 = vpack.c.b16 %v1447, %v1445
    %v1474 = vpack.c.b16 %v1450, %v1448
    %v1475 = vpack.c.b16 %v1451, %v1449
    %v1476 = vpack.c.b16 %v1454, %v1452
    %v1477 = vpack.c.b16 %v1455, %v1453
    %v1478 = vpack.c.b16 %v1458, %v1456
    %v1479 = vpack.c.b16 %v1459, %v1457
    %v1480 = vpack.c.b16 %v1462, %v1460
    %v1481 = vpack.c.b16 %v1463, %v1461
    %v1482 = vpack.c.b16 %v1466, %v1464
    %v1483 = vpack.c.b16 %v1467, %v1465
    %1500 = vmatprep.subr.bf16.mxu0 %v1469
    %1501 = vmatpush1.bf16.msra.mxu0 %v1468
    %1502 = vmatprep.subr.bf16.mxu0 %v1471
    %1503 = vmatpush1.bf16.msra.mxu0 %v1470
    %1504 = vmatprep.subr.bf16.mxu0 %v1473
    %1505 = vmatpush1.bf16.msra.mxu0 %v1472
    %1506 = vmatprep.subr.bf16.mxu0 %v1475
    %1507 = vmatpush1.bf16.msra.mxu0 %v1474
    %1508 = vmatprep.subr.bf16.mxu0 %v1477
    %1509 = vmatpush1.bf16.msra.mxu0 %v1476
    %1510 = vmatprep.subr.bf16.mxu0 %v1479
    %1511 = vmatpush1.bf16.msra.mxu0 %v1478
    %1512 = vmatprep.subr.bf16.mxu0 %v1481
    %1513 = vmatpush1.bf16.msra.mxu0 %v1480
    %1514 = vmatprep.subr.bf16.mxu0 %v1483
    %1515 = vmatpush1.bf16.msra.mxu0 %v1482
    %1516 = vmatprep.subr.bf16.mxu0 0
    %1517 = vmatpush1.bf16.msra.mxu0 0
    %1518 = vmatprep.subr.bf16.mxu0 0
    %1519 = vmatpush1.bf16.msra.mxu0 0
    %1520 = vmatprep.subr.bf16.mxu0 0
    %1521 = vmatpush1.bf16.msra.mxu0 0
    %1522 = vmatprep.subr.bf16.mxu0 0
    %1523 = vmatpush1.bf16.msra.mxu0 0
    %1524 = vmatprep.subr.bf16.mxu0 0
    %1525 = vmatpush1.bf16.msra.mxu0 0
    %1526 = vmatprep.subr.bf16.mxu0 0
    %1527 = vmatpush1.bf16.msra.mxu0 0
    %1528 = vmatprep.subr.bf16.mxu0 0
    %1529 = vmatpush1.bf16.msra.mxu0 0
    %1530 = vmatprep.subr.bf16.mxu0 0
    %1531 = vmatpush1.bf16.msra.mxu0 0
    %1532 = vmatprep.mubr.bf16.mxu0 0
    %1533 = vmatmul.mubr.bf16.gmra.mrb[0].mxu0 %v1389
    %v1534 = vpop.f32.mrb[0].mxu0
    %v1535 = vadd.f32 %v1413, %v1534
    %v1536 = vpop.f32.mrb[0].mxu0
    %v1537 = vadd.f32 %v1417, %v1536
    %v1538 = vpop.f32.mrb[0].mxu0
    %v1539 = vadd.f32 %v1413, %v1538
    %v1540 = vpop.f32.mrb[0].mxu0
    %v1541 = vadd.f32 %v1417, %v1540
    %1542 = vmatprep.mubr.bf16.mxu0 0
    %1543 = vmatmul.mubr.bf16.gmra.mrb[0].mxu0 %v1390
    %v1544 = vpop.f32.mrb[0].mxu0
    %v1545 = vadd.f32 %v1413, %v1544
    %v1546 = vpop.f32.mrb[0].mxu0
    %v1547 = vadd.f32 %v1417, %v1546
    %v1548 = vpop.f32.mrb[0].mxu0
    %v1549 = vadd.f32 %v1413, %v1548
    %v1550 = vpop.f32.mrb[0].mxu0
    %v1551 = vadd.f32 %v1417, %v1550
    %1552 = vmatprep.mubr.bf16.mxu0 0
    %1553 = vmatmul.mubr.bf16.gmra.mrb[0].mxu0 %v1391
    %v1554 = vpop.f32.mrb[0].mxu0
    %v1555 = vadd.f32 %v1413, %v1554
    %v1556 = vpop.f32.mrb[0].mxu0
    %v1557 = vadd.f32 %v1417, %v1556
    %v1558 = vpop.f32.mrb[0].mxu0
    %v1559 = vpop.f32.mrb[0].mxu0
    %1560 = vdwg.mxu0
    %v1561 = vmax.f32 %v1535, 0.0
    %v1562 = vmax.f32 %v1537, 0.0
    %v1563 = vmax.f32 %v1539, 0.0
    %v1564 = vmax.f32 %v1541, 0.0
    %v1565 = vmax.f32 %v1545, 0.0
    %v1566 = vmax.f32 %v1547, 0.0
    %v1567 = vmax.f32 %v1549, 0.0
    %v1568 = vmax.f32 %v1551, 0.0
    %v1569 = vmax.f32 %v1555, 0.0
    %v1570 = vmax.f32 %v1557, 0.0
    %v1571 = vpack.c.bf16 %v1563, %v1561
    %v1572 = vpack.c.bf16 %v1564, %v1562
    %v1573 = vpack.c.bf16 %v1567, %v1565
    %v1574 = vpack.c.bf16 %v1568, %v1566
    %v1575 = vpack.c.bf16 %v1569, %v1569
    %v1576 = vpack.c.bf16 %v1570, %v1570
    %v1577 = vld [vmem:[%s11] sm:$0xff]
    %v1578 = vld [vmem:[%s11 + $0x8] sm:$0xff]
    %v1579 = vld [vmem:[%s11 + $0x10] sm:$0xff]
    %v1580 = vld [vmem:[%s11 + $0x18] sm:$0xf]
    %v1581 = vld [vmem:[%s11 + $0x1c] sm:$0xff]
    %v1582 = vld [vmem:[%s11 + $0x24] sm:$0xff]
    %v1583 = vld [vmem:[%s11 + $0x2c] sm:$0xff]
    %v1584 = vld [vmem:[%s11 + $0x34] sm:$0xf]
    %v1585 = vld [vmem:[%s11 + $0x38] sm:$0xff]
    %v1586 = vld [vmem:[%s11 + $0x40] sm:$0xff]
    %v1587 = vld [vmem:[%s11 + $0x48] sm:$0xff]
    %v1588 = vld [vmem:[%s11 + $0x50] sm:$0xf]
    %v1589 = vld [vmem:[%s11 + $0x54] sm:$0xff]
    %v1590 = vld [vmem:[%s11 + $0x5c] sm:$0xff]
    %v1591 = vld [vmem:[%s11 + $0x64] sm:$0xff]
    %v1592 = vld [vmem:[%s11 + $0x6c] sm:$0xf]
    %v1593 = vld [vmem:[%s11 + $0x70] sm:$0xff]
    %v1594 = vld [vmem:[%s11 + $0x78] sm:$0xff]
    %v1595 = vld [vmem:[%s11 + $0x80] sm:$0xff]
    %v1596 = vld [vmem:[%s11 + $0x88] sm:$0xf]
    %v1597 = vld [vmem:[%s11 + $0x8c] sm:$0xff]
    %v1598 = vld [vmem:[%s11 + $0x94] sm:$0xff]
    %v1599 = vld [vmem:[%s11 + $0x9c] sm:$0xff]
    %v1600 = vld [vmem:[%s11 + $0xa4] sm:$0xf]
    %v1601 = vld [vmem:[%s11 + $0xa8] sm:$0xff]
    %v1602 = vld [vmem:[%s11 + $0xb0] sm:$0xff]
    %v1603 = vld [vmem:[%s11 + $0xb8] sm:$0xff]
    %v1604 = vld [vmem:[%s11 + $0xc0] sm:$0xf]
    %v1605 = vld [vmem:[%s11 + $0xc4] sm:$0xff]
    %v1606 = vld [vmem:[%s11 + $0xcc] sm:$0xff]
    %v1607 = vld [vmem:[%s11 + $0xd4] sm:$0xff]
    %v1608 = vld [vmem:[%s11 + $0xdc] sm:$0xf]
    %v1609 = vld [vmem:[%s11 + $0xe0] sm:$0xff]
    %v1610 = vld [vmem:[%s11 + $0xe8] sm:$0xff]
    %v1611 = vld [vmem:[%s11 + $0xf0] sm:$0xff]
    %v1612 = vld [vmem:[%s11 + $0xf8] sm:$0xf]
    %v1613 = vld [vmem:[%s11 + $0xfc] sm:$0xff]
    %v1614 = vld [vmem:[%s11 + $0x104] sm:$0xff]
    %v1615 = vld [vmem:[%s11 + $0x10c] sm:$0xff]
    %v1616 = vld [vmem:[%s11 + $0x114] sm:$0xf]
    %v1617 = vld [vmem:[%s11 + $0x118] sm:$0xff]
    %v1618 = vld [vmem:[%s11 + $0x120] sm:$0xff]
    %v1619 = vld [vmem:[%s11 + $0x128] sm:$0xff]
    %v1620 = vld [vmem:[%s11 + $0x130] sm:$0xf]
    %v1621 = vld [vmem:[%s11 + $0x134] sm:$0xff]
    %v1622 = vld [vmem:[%s11 + $0x13c] sm:$0xff]
    %v1623 = vld [vmem:[%s11 + $0x144] sm:$0xff]
    %v1624 = vld [vmem:[%s11 + $0x14c] sm:$0xf]
    %v1625 = vld [vmem:[%s11 + $0x150] sm:$0xff]
    %v1626 = vld [vmem:[%s11 + $0x158] sm:$0xff]
    %v1627 = vld [vmem:[%s11 + $0x160] sm:$0xff]
    %v1628 = vld [vmem:[%s11 + $0x168] sm:$0xf]
    %v1629 = vld [vmem:[%s11 + $0x16c] sm:$0xff]
    %v1630 = vld [vmem:[%s11 + $0x174] sm:$0xff]
    %v1631 = vld [vmem:[%s11 + $0x17c] sm:$0xff]
    %v1632 = vld [vmem:[%s11 + $0x184] sm:$0xf]
    %v1633 = vld [vmem:[%s11 + $0x188] sm:$0xff]
    %v1634 = vld [vmem:[%s11 + $0x190] sm:$0xff]
    %v1635 = vld [vmem:[%s11 + $0x198] sm:$0xff]
    %v1636 = vld [vmem:[%s11 + $0x1a0] sm:$0xf]
    %v1637 = vld [vmem:[%s11 + $0x1a4] sm:$0xff]
    %v1638 = vld [vmem:[%s11 + $0x1ac] sm:$0xff]
    %v1639 = vld [vmem:[%s11 + $0x1b4] sm:$0xff]
    %v1640 = vld [vmem:[%s11 + $0x1bc] sm:$0xf]
    %v1641 = vld [vmem:[%s11 + $0x1c0] sm:$0xff]
    %v1642 = vld [vmem:[%s11 + $0x1c8] sm:$0xff]
    %v1643 = vld [vmem:[%s11 + $0x1d0] sm:$0xff]
    %v1644 = vld [vmem:[%s11 + $0x1d8] sm:$0xf]
    %v1645 = vld [vmem:[%s11 + $0x1dc] sm:$0xff]
    %v1646 = vld [vmem:[%s11 + $0x1e4] sm:$0xff]
    %v1647 = vld [vmem:[%s11 + $0x1ec] sm:$0xff]
    %v1648 = vld [vmem:[%s11 + $0x1f4] sm:$0xf]
    %v1649 = vld [vmem:[%s11 + $0x1f8] sm:$0xff]
    %v1650 = vld [vmem:[%s11 + $0x200] sm:$0xff]
    %v1651 = vld [vmem:[%s11 + $0x208] sm:$0xff]
    %v1652 = vld [vmem:[%s11 + $0x210] sm:$0xf]
    %v1653 = vld [vmem:[%s11 + $0x214] sm:$0xff]
    %v1654 = vld [vmem:[%s11 + $0x21c] sm:$0xff]
    %v1655 = vld [vmem:[%s11 + $0x224] sm:$0xff]
    %v1656 = vld [vmem:[%s11 + $0x22c] sm:$0xf]
    %v1657 = vld [vmem:[%s11 + $0x230] sm:$0xff]
    %v1658 = vld [vmem:[%s11 + $0x238] sm:$0xff]
    %v1659 = vld [vmem:[%s11 + $0x240] sm:$0xff]
    %v1660 = vld [vmem:[%s11 + $0x248] sm:$0xf]
    %v1661 = vld [vmem:[%s11 + $0x24c] sm:$0xff]
    %v1662 = vld [vmem:[%s11 + $0x254] sm:$0xff]
    %v1663 = vld [vmem:[%s11 + $0x25c] sm:$0xff]
    %v1664 = vld [vmem:[%s11 + $0x264] sm:$0xf]
    %v1665 = vld [vmem:[%s11 + $0x268] sm:$0xff]
    %v1666 = vld [vmem:[%s11 + $0x270] sm:$0xff]
    %v1667 = vld [vmem:[%s11 + $0x278] sm:$0xff]
    %v1668 = vld [vmem:[%s11 + $0x280] sm:$0xf]
    %v1669 = vld [vmem:[%s11 + $0x284] sm:$0xff]
    %v1670 = vld [vmem:[%s11 + $0x28c] sm:$0xff]
    %v1671 = vld [vmem:[%s11 + $0x294] sm:$0xff]
    %v1672 = vld [vmem:[%s11 + $0x29c] sm:$0xf]
    %v1673 = vld [vmem:[%s11 + $0x2a0] sm:$0xff]
    %v1674 = vld [vmem:[%s11 + $0x2a8] sm:$0xff]
    %v1675 = vld [vmem:[%s11 + $0x2b0] sm:$0xff]
    %v1676 = vld [vmem:[%s11 + $0x2b8] sm:$0xf]
    %v1677 = vld [vmem:[%s11 + $0x2bc] sm:$0xff]
    %v1678 = vld [vmem:[%s11 + $0x2c4] sm:$0xff]
    %v1679 = vld [vmem:[%s11 + $0x2cc] sm:$0xff]
    %v1680 = vld [vmem:[%s11 + $0x2d4] sm:$0xf]
    %v1681 = vld [vmem:[%s11 + $0x2d8] sm:$0xff]
    %v1682 = vld [vmem:[%s11 + $0x2e0] sm:$0xff]
    %v1683 = vld [vmem:[%s11 + $0x2e8] sm:$0xff]
    %v1684 = vld [vmem:[%s11 + $0x2f0] sm:$0xf]
    %v1685 = vld [vmem:[%s11 + $0x2f4] sm:$0xff]
    %v1686 = vld [vmem:[%s11 + $0x2fc] sm:$0xff]
    %v1687 = vld [vmem:[%s11 + $0x304] sm:$0xff]
    %v1688 = vld [vmem:[%s11 + $0x30c] sm:$0xf]
    %v1689 = vld [vmem:[%s11 + $0x310] sm:$0xff]
    %v1690 = vld [vmem:[%s11 + $0x318] sm:$0xff]
    %v1691 = vld [vmem:[%s11 + $0x320] sm:$0xff]
    %v1692 = vld [vmem:[%s11 + $0x328] sm:$0xf]
    %v1693 = vld [vmem:[%s11 + $0x32c] sm:$0xff]
    %v1694 = vld [vmem:[%s11 + $0x334] sm:$0xff]
    %v1695 = vld [vmem:[%s11 + $0x33c] sm:$0xff]
    %v1696 = vld [vmem:[%s11 + $0x344] sm:$0xf]
    %v1697 = vld [vmem:[%s11 + $0x348] sm:$0xff]
    %v1698 = vld [vmem:[%s11 + $0x350] sm:$0xff]
    %v1699 = vld [vmem:[%s11 + $0x358] sm:$0xff]
    %v1700 = vld [vmem:[%s11 + $0x360] sm:$0xf]
    %v1701 = vld [vmem:[%s11 + $0x364] sm:$0xff]
    %v1702 = vld [vmem:[%s11 + $0x36c] sm:$0xff]
    %v1703 = vld [vmem:[%s11 + $0x374] sm:$0xff]
    %v1704 = vld [vmem:[%s11 + $0x37c] sm:$0xf]
    %v1705 = vld [vmem:[%s12] sm:$0x7f]
    %v1707 = vlaneseq
    %v1708 = vshrl.u32 %v1707, 7
    %v1709 = vsub.s32 0, %v1708
    %v1710 = vrot.slane %v1705, %v1709
    %v1711 = vlaneseq
    %v1712 = vshrl.u32 %v1711, 7
    %v1713 = vsub.s32 1, %v1712
    %v1714 = vrot.slane %v1705, %v1713
    %v1715 = vlaneseq
    %v1716 = vshrl.u32 %v1715, 7
    %v1717 = vsub.s32 2, %v1716
    %v1718 = vrot.slane %v1705, %v1717
    %v1719 = vlaneseq
    %v1720 = vshrl.u32 %v1719, 7
    %v1721 = vsub.s32 3, %v1720
    %v1722 = vrot.slane %v1705, %v1721
    %v1723 = vlaneseq
    %v1724 = vshrl.u32 %v1723, 7
    %v1725 = vsub.s32 4, %v1724
    %v1726 = vrot.slane %v1705, %v1725
    %v1727 = vlaneseq
    %v1728 = vshrl.u32 %v1727, 7
    %v1729 = vsub.s32 5, %v1728
    %v1730 = vrot.slane %v1705, %v1729
    %v1731 = vlaneseq
    %v1732 = vshrl.u32 %v1731, 7
    %v1733 = vsub.s32 6, %v1732
    %v1734 = vrot.slane %v1705, %v1733
    %v1870 = vunpack.c.l.b16 %v1577
    %v1871 = vunpack.c.h.b16 %v1577
    %v1872 = vunpack.c.l.b16 %v1578
    %v1873 = vunpack.c.h.b16 %v1578
    %v1874 = vunpack.c.l.b16 %v1579
    %v1875 = vunpack.c.h.b16 %v1579
    %v1876 = vunpack.c.l.b16 %v1580
    %v1877 = vunpack.c.l.b16 %v1581
    %v1878 = vunpack.c.h.b16 %v1581
    %v1879 = vunpack.c.l.b16 %v1582
    %v1880 = vunpack.c.h.b16 %v1582
    %v1881 = vunpack.c.l.b16 %v1583
    %v1882 = vunpack.c.h.b16 %v1583
    %v1883 = vunpack.c.l.b16 %v1584
    %v1884 = vunpack.c.l.b16 %v1585
    %v1885 = vunpack.c.h.b16 %v1585
    %v1886 = vunpack.c.l.b16 %v1586
    %v1887 = vunpack.c.h.b16 %v1586
    %v1888 = vunpack.c.l.b16 %v1587
    %v1889 = vunpack.c.h.b16 %v1587
    %v1890 = vunpack.c.l.b16 %v1588
    %v1891 = vunpack.c.l.b16 %v1589
    %v1892 = vunpack.c.h.b16 %v1589
    %v1893 = vunpack.c.l.b16 %v1590
    %v1894 = vunpack.c.h.b16 %v1590
    %v1895 = vunpack.c.l.b16 %v1591
    %v1896 = vunpack.c.h.b16 %v1591
    %v1897 = vunpack.c.l.b16 %v1592
    %v1898 = vunpack.c.l.b16 %v1593
    %v1899 = vunpack.c.h.b16 %v1593
    %v1900 = vunpack.c.l.b16 %v1594
    %v1901 = vunpack.c.h.b16 %v1594
    %v1902 = vunpack.c.l.b16 %v1595
    %v1903 = vunpack.c.h.b16 %v1595
    %v1904 = vunpack.c.l.b16 %v1596
    %v1905 = vunpack.c.l.b16 %v1597
    %v1906 = vunpack.c.h.b16 %v1597
    %v1907 = vunpack.c.l.b16 %v1598
    %v1908 = vunpack.c.h.b16 %v1598
    %v1909 = vunpack.c.l.b16 %v1599
    %v1910 = vunpack.c.h.b16 %v1599
    %v1911 = vunpack.c.l.b16 %v1600
    %v1912 = vunpack.c.l.b16 %v1601
    %v1913 = vunpack.c.h.b16 %v1601
    %v1914 = vunpack.c.l.b16 %v1602
    %v1915 = vunpack.c.h.b16 %v1602
    %v1916 = vunpack.c.l.b16 %v1603
    %v1917 = vunpack.c.h.b16 %v1603
    %v1918 = vunpack.c.l.b16 %v1604
    %v1919 = vunpack.c.l.b16 %v1605
    %v1920 = vunpack.c.h.b16 %v1605
    %v1921 = vunpack.c.l.b16 %v1606
    %v1922 = vunpack.c.h.b16 %v1606
    %v1923 = vunpack.c.l.b16 %v1607
    %v1924 = vunpack.c.h.b16 %v1607
    %v1925 = vunpack.c.l.b16 %v1608
    %v1926 = vunpack.c.l.b16 %v1609
    %v1927 = vunpack.c.h.b16 %v1609
    %v1928 = vunpack.c.l.b16 %v1610
    %v1929 = vunpack.c.h.b16 %v1610
    %v1930 = vunpack.c.l.b16 %v1611
    %v1931 = vunpack.c.h.b16 %v1611
    %v1932 = vunpack.c.l.b16 %v1612
    %v1933 = vunpack.c.l.b16 %v1613
    %v1934 = vunpack.c.h.b16 %v1613
    %v1935 = vunpack.c.l.b16 %v1614
    %v1936 = vunpack.c.h.b16 %v1614
    %v1937 = vunpack.c.l.b16 %v1615
    %v1938 = vunpack.c.h.b16 %v1615
    %v1939 = vunpack.c.l.b16 %v1616
    %v1940 = vunpack.c.l.b16 %v1617
    %v1941 = vunpack.c.h.b16 %v1617
    %v1942 = vunpack.c.l.b16 %v1618
    %v1943 = vunpack.c.h.b16 %v1618
    %v1944 = vunpack.c.l.b16 %v1619
    %v1945 = vunpack.c.h.b16 %v1619
    %v1946 = vunpack.c.l.b16 %v1620
    %v1947 = vunpack.c.l.b16 %v1621
    %v1948 = vunpack.c.h.b16 %v1621
    %v1949 = vunpack.c.l.b16 %v1622
    %v1950 = vunpack.c.h.b16 %v1622
    %v1951 = vunpack.c.l.b16 %v1623
    %v1952 = vunpack.c.h.b16 %v1623
    %v1953 = vunpack.c.l.b16 %v1624
    %v1954 = vunpack.c.l.b16 %v1625
    %v1955 = vunpack.c.h.b16 %v1625
    %v1956 = vunpack.c.l.b16 %v1626
    %v1957 = vunpack.c.h.b16 %v1626
    %v1958 = vunpack.c.l.b16 %v1627
    %v1959 = vunpack.c.h.b16 %v1627
    %v1960 = vunpack.c.l.b16 %v1628
    %v1961 = vunpack.c.l.b16 %v1629
    %v1962 = vunpack.c.h.b16 %v1629
    %v1963 = vunpack.c.l.b16 %v1630
    %v1964 = vunpack.c.h.b16 %v1630
    %v1965 = vunpack.c.l.b16 %v1631
    %v1966 = vunpack.c.h.b16 %v1631
    %v1967 = vunpack.c.l.b16 %v1632
    %v1968 = vunpack.c.l.b16 %v1633
    %v1969 = vunpack.c.h.b16 %v1633
    %v1970 = vunpack.c.l.b16 %v1634
    %v1971 = vunpack.c.h.b16 %v1634
    %v1972 = vunpack.c.l.b16 %v1635
    %v1973 = vunpack.c.h.b16 %v1635
    %v1974 = vunpack.c.l.b16 %v1636
    %v1975 = vunpack.c.l.b16 %v1637
    %v1976 = vunpack.c.h.b16 %v1637
    %v1977 = vunpack.c.l.b16 %v1638
    %v1978 = vunpack.c.h.b16 %v1638
    %v1979 = vunpack.c.l.b16 %v1639
    %v1980 = vunpack.c.h.b16 %v1639
    %v1981 = vunpack.c.l.b16 %v1640
    %v1982 = vunpack.c.l.b16 %v1641
    %v1983 = vunpack.c.h.b16 %v1641
    %v1984 = vunpack.c.l.b16 %v1642
    %v1985 = vunpack.c.h.b16 %v1642
    %v1986 = vunpack.c.l.b16 %v1643
    %v1987 = vunpack.c.h.b16 %v1643
    %v1988 = vunpack.c.l.b16 %v1644
    %v1989 = vunpack.c.l.b16 %v1645
    %v1990 = vunpack.c.h.b16 %v1645
    %v1991 = vunpack.c.l.b16 %v1646
    %v1992 = vunpack.c.h.b16 %v1646
    %v1993 = vunpack.c.l.b16 %v1647
    %v1994 = vunpack.c.h.b16 %v1647
    %v1995 = vunpack.c.l.b16 %v1648
    %v1996 = vunpack.c.l.b16 %v1649
    %v1997 = vunpack.c.h.b16 %v1649
    %v1998 = vunpack.c.l.b16 %v1650
    %v1999 = vunpack.c.h.b16 %v1650
    %v2000 = vunpack.c.l.b16 %v1651
    %v2001 = vunpack.c.h.b16 %v1651
    %v2002 = vunpack.c.l.b16 %v1652
    %v2003 = vunpack.c.l.b16 %v1653
    %v2004 = vunpack.c.h.b16 %v1653
    %v2005 = vunpack.c.l.b16 %v1654
    %v2006 = vunpack.c.h.b16 %v1654
    %v2007 = vunpack.c.l.b16 %v1655
    %v2008 = vunpack.c.h.b16 %v1655
    %v2009 = vunpack.c.l.b16 %v1656
    %v2010 = vunpack.c.l.b16 %v1657
    %v2011 = vunpack.c.h.b16 %v1657
    %v2012 = vunpack.c.l.b16 %v1658
    %v2013 = vunpack.c.h.b16 %v1658
    %v2014 = vunpack.c.l.b16 %v1659
    %v2015 = vunpack.c.h.b16 %v1659
    %v2016 = vunpack.c.l.b16 %v1660
    %v2017 = vunpack.c.l.b16 %v1661
    %v2018 = vunpack.c.h.b16 %v1661
    %v2019 = vunpack.c.l.b16 %v1662
    %v2020 = vunpack.c.h.b16 %v1662
    %v2021 = vunpack.c.l.b16 %v1663
    %v2022 = vunpack.c.h.b16 %v1663
    %v2023 = vunpack.c.l.b16 %v1664
    %v2024 = vunpack.c.l.b16 %v1665
    %v2025 = vunpack.c.h.b16 %v1665
    %v2026 = vunpack.c.l.b16 %v1666
    %v2027 = vunpack.c.h.b16 %v1666
    %v2028 = vunpack.c.l.b16 %v1667
    %v2029 = vunpack.c.h.b16 %v1667
    %v2030 = vunpack.c.l.b16 %v1668
    %v2031 = vunpack.c.l.b16 %v1669
    %v2032 = vunpack.c.h.b16 %v1669
    %v2033 = vunpack.c.l.b16 %v1670
    %v2034 = vunpack.c.h.b16 %v1670
    %v2035 = vunpack.c.l.b16 %v1671
    %v2036 = vunpack.c.h.b16 %v1671
    %v2037 = vunpack.c.l.b16 %v1672
    %v2038 = vunpack.c.l.b16 %v1673
    %v2039 = vunpack.c.h.b16 %v1673
    %v2040 = vunpack.c.l.b16 %v1674
    %v2041 = vunpack.c.h.b16 %v1674
    %v2042 = vunpack.c.l.b16 %v1675
    %v2043 = vunpack.c.h.b16 %v1675
    %v2044 = vunpack.c.l.b16 %v1676
    %v2045 = vunpack.c.l.b16 %v1677
    %v2046 = vunpack.c.h.b16 %v1677
    %v2047 = vunpack.c.l.b16 %v1678
    %v2048 = vunpack.c.h.b16 %v1678
    %v2049 = vunpack.c.l.b16 %v1679
    %v2050 = vunpack.c.h.b16 %v1679
    %v2051 = vunpack.c.l.b16 %v1680
    %v2052 = vunpack.c.l.b16 %v1681
    %v2053 = vunpack.c.h.b16 %v1681
    %v2054 = vunpack.c.l.b16 %v1682
    %v2055 = vunpack.c.h.b16 %v1682
    %v2056 = vunpack.c.l.b16 %v1683
    %v2057 = vunpack.c.h.b16 %v1683
    %v2058 = vunpack.c.l.b16 %v1684
    %v2059 = vunpack.c.l.b16 %v1685
    %v2060 = vunpack.c.h.b16 %v1685
    %v2061 = vunpack.c.l.b16 %v1686
    %v2062 = vunpack.c.h.b16 %v1686
    %v2063 = vunpack.c.l.b16 %v1687
    %v2064 = vunpack.c.h.b16 %v1687
    %v2065 = vunpack.c.l.b16 %v1688
    %v2066 = vunpack.c.l.b16 %v1689
    %v2067 = vunpack.c.h.b16 %v1689
    %v2068 = vunpack.c.l.b16 %v1690
    %v2069 = vunpack.c.h.b16 %v1690
    %v2070 = vunpack.c.l.b16 %v1691
    %v2071 = vunpack.c.h.b16 %v1691
    %v2072 = vunpack.c.l.b16 %v1692
    %v2073 = vunpack.c.l.b16 %v1693
    %v2074 = vunpack.c.h.b16 %v1693
    %v2075 = vunpack.c.l.b16 %v1694
    %v2076 = vunpack.c.h.b16 %v1694
    %v2077 = vunpack.c.l.b16 %v1695
    %v2078 = vunpack.c.h.b16 %v1695
    %v2079 = vunpack.c.l.b16 %v1696
    %v2080 = vunpack.c.l.b16 %v1697
    %v2081 = vunpack.c.h.b16 %v1697
    %v2082 = vunpack.c.l.b16 %v1698
    %v2083 = vunpack.c.h.b16 %v1698
    %v2084 = vunpack.c.l.b16 %v1699
    %v2085 = vunpack.c.h.b16 %v1699
    %v2086 = vunpack.c.l.b16 %v1700
    %v2087 = vunpack.c.l.b16 %v1701
    %v2088 = vunpack.c.h.b16 %v1701
    %v2089 = vunpack.c.l.b16 %v1702
    %v2090 = vunpack.c.h.b16 %v1702
    %v2091 = vunpack.c.l.b16 %v1703
    %v2092 = vunpack.c.h.b16 %v1703
    %v2093 = vunpack.c.l.b16 %v1704
    %v2094 = vpack.c.b16 %v1877, %v1870
    %v2095 = vpack.c.b16 %v1878, %v1871
    %v2096 = vpack.c.b16 %v1879, %v1872
    %v2097 = vpack.c.b16 %v1880, %v1873
    %v2098 = vpack.c.b16 %v1881, %v1874
    %v2099 = vpack.c.b16 %v1882, %v1875
    %v2100 = vpack.c.b16 %v1883, %v1876
    %v2101 = vpack.c.b16 %v1891, %v1884
    %v2102 = vpack.c.b16 %v1892, %v1885
    %v2103 = vpack.c.b16 %v1893, %v1886
    %v2104 = vpack.c.b16 %v1894, %v1887
    %v2105 = vpack.c.b16 %v1895, %v1888
    %v2106 = vpack.c.b16 %v1896, %v1889
    %v2107 = vpack.c.b16 %v1897, %v1890
    %v2108 = vpack.c.b16 %v1905, %v1898
    %v2109 = vpack.c.b16 %v1906, %v1899
    %v2110 = vpack.c.b16 %v1907, %v1900
    %v2111 = vpack.c.b16 %v1908, %v1901
    %v2112 = vpack.c.b16 %v1909, %v1902
    %v2113 = vpack.c.b16 %v1910, %v1903
    %v2114 = vpack.c.b16 %v1911, %v1904
    %v2115 = vpack.c.b16 %v1919, %v1912
    %v2116 = vpack.c.b16 %v1920, %v1913
    %v2117 = vpack.c.b16 %v1921, %v1914
    %v2118 = vpack.c.b16 %v1922, %v1915
    %v2119 = vpack.c.b16 %v1923, %v1916
    %v2120 = vpack.c.b16 %v1924, %v1917
    %v2121 = vpack.c.b16 %v1925, %v1918
    %v2122 = vpack.c.b16 %v1933, %v1926
    %v2123 = vpack.c.b16 %v1934, %v1927
    %v2124 = vpack.c.b16 %v1935, %v1928
    %v2125 = vpack.c.b16 %v1936, %v1929
    %v2126 = vpack.c.b16 %v1937, %v1930
    %v2127 = vpack.c.b16 %v1938, %v1931
    %v2128 = vpack.c.b16 %v1939, %v1932
    %v2129 = vpack.c.b16 %v1947, %v1940
    %v2130 = vpack.c.b16 %v1948, %v1941
    %v2131 = vpack.c.b16 %v1949, %v1942
    %v2132 = vpack.c.b16 %v1950, %v1943
    %v2133 = vpack.c.b16 %v1951, %v1944
    %v2134 = vpack.c.b16 %v1952, %v1945
    %v2135 = vpack.c.b16 %v1953, %v1946
    %v2136 = vpack.c.b16 %v1961, %v1954
    %v2137 = vpack.c.b16 %v1962, %v1955
    %v2138 = vpack.c.b16 %v1963, %v1956
    %v2139 = vpack.c.b16 %v1964, %v1957
    %v2140 = vpack.c.b16 %v1965, %v1958
    %v2141 = vpack.c.b16 %v1966, %v1959
    %v2142 = vpack.c.b16 %v1967, %v1960
    %v2143 = vpack.c.b16 %v1975, %v1968
    %v2144 = vpack.c.b16 %v1976, %v1969
    %v2145 = vpack.c.b16 %v1977, %v1970
    %v2146 = vpack.c.b16 %v1978, %v1971
    %v2147 = vpack.c.b16 %v1979, %v1972
    %v2148 = vpack.c.b16 %v1980, %v1973
    %v2149 = vpack.c.b16 %v1981, %v1974
    %v2150 = vpack.c.b16 %v1989, %v1982
    %v2151 = vpack.c.b16 %v1990, %v1983
    %v2152 = vpack.c.b16 %v1991, %v1984
    %v2153 = vpack.c.b16 %v1992, %v1985
    %v2154 = vpack.c.b16 %v1993, %v1986
    %v2155 = vpack.c.b16 %v1994, %v1987
    %v2156 = vpack.c.b16 %v1995, %v1988
    %v2157 = vpack.c.b16 %v2003, %v1996
    %v2158 = vpack.c.b16 %v2004, %v1997
    %v2159 = vpack.c.b16 %v2005, %v1998
    %v2160 = vpack.c.b16 %v2006, %v1999
    %v2161 = vpack.c.b16 %v2007, %v2000
    %v2162 = vpack.c.b16 %v2008, %v2001
    %v2163 = vpack.c.b16 %v2009, %v2002
    %v2164 = vpack.c.b16 %v2017, %v2010
    %v2165 = vpack.c.b16 %v2018, %v2011
    %v2166 = vpack.c.b16 %v2019, %v2012
    %v2167 = vpack.c.b16 %v2020, %v2013
    %v2168 = vpack.c.b16 %v2021, %v2014
    %v2169 = vpack.c.b16 %v2022, %v2015
    %v2170 = vpack.c.b16 %v2023, %v2016
    %v2171 = vpack.c.b16 %v2031, %v2024
    %v2172 = vpack.c.b16 %v2032, %v2025
    %v2173 = vpack.c.b16 %v2033, %v2026
    %v2174 = vpack.c.b16 %v2034, %v2027
    %v2175 = vpack.c.b16 %v2035, %v2028
    %v2176 = vpack.c.b16 %v2036, %v2029
    %v2177 = vpack.c.b16 %v2037, %v2030
    %v2178 = vpack.c.b16 %v2045, %v2038
    %v2179 = vpack.c.b16 %v2046, %v2039
    %v2180 = vpack.c.b16 %v2047, %v2040
    %v2181 = vpack.c.b16 %v2048, %v2041
    %v2182 = vpack.c.b16 %v2049, %v2042
    %v2183 = vpack.c.b16 %v2050, %v2043
    %v2184 = vpack.c.b16 %v2051, %v2044
    %v2185 = vpack.c.b16 %v2059, %v2052
    %v2186 = vpack.c.b16 %v2060, %v2053
    %v2187 = vpack.c.b16 %v2061, %v2054
    %v2188 = vpack.c.b16 %v2062, %v2055
    %v2189 = vpack.c.b16 %v2063, %v2056
    %v2190 = vpack.c.b16 %v2064, %v2057
    %v2191 = vpack.c.b16 %v2065, %v2058
    %v2192 = vpack.c.b16 %v2073, %v2066
    %v2193 = vpack.c.b16 %v2074, %v2067
    %v2194 = vpack.c.b16 %v2075, %v2068
    %v2195 = vpack.c.b16 %v2076, %v2069
    %v2196 = vpack.c.b16 %v2077, %v2070
    %v2197 = vpack.c.b16 %v2078, %v2071
    %v2198 = vpack.c.b16 %v2079, %v2072
    %v2199 = vpack.c.b16 %v2087, %v2080
    %v2200 = vpack.c.b16 %v2088, %v2081
    %v2201 = vpack.c.b16 %v2089, %v2082
    %v2202 = vpack.c.b16 %v2090, %v2083
    %v2203 = vpack.c.b16 %v2091, %v2084
    %v2204 = vpack.c.b16 %v2092, %v2085
    %v2205 = vpack.c.b16 %v2093, %v2086
    %2318 = vmatprep.subr.bf16.mxu0 %v2095
    %2319 = vmatpush1.bf16.msra.mxu0 %v2094
    %2320 = vmatprep.subr.bf16.mxu0 %v2102
    %2321 = vmatpush1.bf16.msra.mxu0 %v2101
    %2322 = vmatprep.subr.bf16.mxu0 %v2109
    %2323 = vmatpush1.bf16.msra.mxu0 %v2108
    %2324 = vmatprep.subr.bf16.mxu0 %v2116
    %2325 = vmatpush1.bf16.msra.mxu0 %v2115
    %2326 = vmatprep.subr.bf16.mxu0 %v2123
    %2327 = vmatpush1.bf16.msra.mxu0 %v2122
    %2328 = vmatprep.subr.bf16.mxu0 %v2130
    %2329 = vmatpush1.bf16.msra.mxu0 %v2129
    %2330 = vmatprep.subr.bf16.mxu0 %v2137
    %2331 = vmatpush1.bf16.msra.mxu0 %v2136
    %2332 = vmatprep.subr.bf16.mxu0 %v2144
    %2333 = vmatpush1.bf16.msra.mxu0 %v2143
    %2334 = vmatprep.subr.bf16.mxu0 %v2151
    %2335 = vmatpush1.bf16.msra.mxu0 %v2150
    %2336 = vmatprep.subr.bf16.mxu0 %v2158
    %2337 = vmatpush1.bf16.msra.mxu0 %v2157
    %2338 = vmatprep.subr.bf16.mxu0 %v2165
    %2339 = vmatpush1.bf16.msra.mxu0 %v2164
    %2340 = vmatprep.subr.bf16.mxu0 %v2172
    %2341 = vmatpush1.bf16.msra.mxu0 %v2171
    %2342 = vmatprep.subr.bf16.mxu0 %v2179
    %2343 = vmatpush1.bf16.msra.mxu0 %v2178
    %2344 = vmatprep.subr.bf16.mxu0 %v2186
    %2345 = vmatpush1.bf16.msra.mxu0 %v2185
    %2346 = vmatprep.subr.bf16.mxu0 %v2193
    %2347 = vmatpush1.bf16.msra.mxu0 %v2192
    %2348 = vmatprep.subr.bf16.mxu0 %v2200
    %2349 = vmatpush1.bf16.msra.mxu0 %v2199
    %2350 = vmatprep.mubr.bf16.mxu0 %v1572
    %2351 = vmatmul.mubr.bf16.gmra.mrb[0].mxu0 %v1571
    %v2352 = vpop.f32.mrb[0].mxu0
    %v2353 = vadd.f32 %v1710, %v2352
    %v2354 = vpop.f32.mrb[0].mxu0
    %v2355 = vadd.f32 %v1714, %v2354
    %v2356 = vpop.f32.mrb[0].mxu0
    %v2357 = vadd.f32 %v1710, %v2356
    %v2358 = vpop.f32.mrb[0].mxu0
    %v2359 = vadd.f32 %v1714, %v2358
    %2360 = vmatprep.mubr.bf16.mxu0 %v1574
    %2361 = vmatmul.mubr.bf16.gmra.mrb[0].mxu0 %v1573
    %v2362 = vpop.f32.mrb[0].mxu0
    %v2363 = vadd.f32 %v1710, %v2362
    %v2364 = vpop.f32.mrb[0].mxu0
    %v2365 = vadd.f32 %v1714, %v2364
    %v2366 = vpop.f32.mrb[0].mxu0
    %v2367 = vadd.f32 %v1710, %v2366
    %v2368 = vpop.f32.mrb[0].mxu0
    %v2369 = vadd.f32 %v1714, %v2368
    %2370 = vmatprep.mubr.bf16.mxu0 %v1576
    %2371 = vmatmul.mubr.bf16.gmra.mrb[0].mxu0 %v1575
    %v2372 = vpop.f32.mrb[0].mxu0
    %v2373 = vadd.f32 %v1710, %v2372
    %v2374 = vpop.f32.mrb[0].mxu0
    %v2375 = vadd.f32 %v1714, %v2374
    %v2376 = vpop.f32.mrb[0].mxu0
    %v2377 = vpop.f32.mrb[0].mxu0
    %2378 = vdwg.mxu0
    %2379 = vmatprep.subr.bf16.mxu0 %v2097
    %2380 = vmatpush1.bf16.msra.mxu0 %v2096
    %2381 = vmatprep.subr.bf16.mxu0 %v2104
    %2382 = vmatpush1.bf16.msra.mxu0 %v2103
    %2383 = vmatprep.subr.bf16.mxu0 %v2111
    %2384 = vmatpush1.bf16.msra.mxu0 %v2110
    %2385 = vmatprep.subr.bf16.mxu0 %v2118
    %2386 = vmatpush1.bf16.msra.mxu0 %v2117
    %2387 = vmatprep.subr.bf16.mxu0 %v2125
    %2388 = vmatpush1.bf16.msra.mxu0 %v2124
    %2389 = vmatprep.subr.bf16.mxu0 %v2132
    %2390 = vmatpush1.bf16.msra.mxu0 %v2131
    %2391 = vmatprep.subr.bf16.mxu0 %v2139
    %2392 = vmatpush1.bf16.msra.mxu0 %v2138
    %2393 = vmatprep.subr.bf16.mxu0 %v2146
    %2394 = vmatpush1.bf16.msra.mxu0 %v2145
    %2395 = vmatprep.subr.bf16.mxu0 %v2153
    %2396 = vmatpush1.bf16.msra.mxu0 %v2152
    %2397 = vmatprep.subr.bf16.mxu0 %v2160
    %2398 = vmatpush1.bf16.msra.mxu0 %v2159
    %2399 = vmatprep.subr.bf16.mxu0 %v2167
    %2400 = vmatpush1.bf16.msra.mxu0 %v2166
    %2401 = vmatprep.subr.bf16.mxu0 %v2174
    %2402 = vmatpush1.bf16.msra.mxu0 %v2173
    %2403 = vmatprep.subr.bf16.mxu0 %v2181
    %2404 = vmatpush1.bf16.msra.mxu0 %v2180
    %2405 = vmatprep.subr.bf16.mxu0 %v2188
    %2406 = vmatpush1.bf16.msra.mxu0 %v2187
    %2407 = vmatprep.subr.bf16.mxu0 %v2195
    %2408 = vmatpush1.bf16.msra.mxu0 %v2194
    %2409 = vmatprep.subr.bf16.mxu0 %v2202
    %2410 = vmatpush1.bf16.msra.mxu0 %v2201
    %2411 = vmatprep.mubr.bf16.mxu0 %v1572
    %2412 = vmatmul.mubr.bf16.gmra.mrb[0].mxu0 %v1571
    %v2413 = vpop.f32.mrb[0].mxu0
    %v2414 = vadd.f32 %v1718, %v2413
    %v2415 = vpop.f32.mrb[0].mxu0
    %v2416 = vadd.f32 %v1722, %v2415
    %v2417 = vpop.f32.mrb[0].mxu0
    %v2418 = vadd.f32 %v1718, %v2417
    %v2419 = vpop.f32.mrb[0].mxu0
    %v2420 = vadd.f32 %v1722, %v2419
    %2421 = vmatprep.mubr.bf16.mxu0 %v1574
    %2422 = vmatmul.mubr.bf16.gmra.mrb[0].mxu0 %v1573
    %v2423 = vpop.f32.mrb[0].mxu0
    %v2424 = vadd.f32 %v1718, %v2423
    %v2425 = vpop.f32.mrb[0].mxu0
    %v2426 = vadd.f32 %v1722, %v2425
    %v2427 = vpop.f32.mrb[0].mxu0
    %v2428 = vadd.f32 %v1718, %v2427
    %v2429 = vpop.f32.mrb[0].mxu0
    %v2430 = vadd.f32 %v1722, %v2429
    %2431 = vmatprep.mubr.bf16.mxu0 %v1576
    %2432 = vmatmul.mubr.bf16.gmra.mrb[0].mxu0 %v1575
    %v2433 = vpop.f32.mrb[0].mxu0
    %v2434 = vadd.f32 %v1718, %v2433
    %v2435 = vpop.f32.mrb[0].mxu0
    %v2436 = vadd.f32 %v1722, %v2435
    %v2437 = vpop.f32.mrb[0].mxu0
    %v2438 = vpop.f32.mrb[0].mxu0
    %2439 = vdwg.mxu0
    %2440 = vmatprep.subr.bf16.mxu0 %v2099
    %2441 = vmatpush1.bf16.msra.mxu0 %v2098
    %2442 = vmatprep.subr.bf16.mxu0 %v2106
    %2443 = vmatpush1.bf16.msra.mxu0 %v2105
    %2444 = vmatprep.subr.bf16.mxu0 %v2113
    %2445 = vmatpush1.bf16.msra.mxu0 %v2112
    %2446 = vmatprep.subr.bf16.mxu0 %v2120
    %2447 = vmatpush1.bf16.msra.mxu0 %v2119
    %2448 = vmatprep.subr.bf16.mxu0 %v2127
    %2449 = vmatpush1.bf16.msra.mxu0 %v2126
    %2450 = vmatprep.subr.bf16.mxu0 %v2134
    %2451 = vmatpush1.bf16.msra.mxu0 %v2133
    %2452 = vmatprep.subr.bf16.mxu0 %v2141
    %2453 = vmatpush1.bf16.msra.mxu0 %v2140
    %2454 = vmatprep.subr.bf16.mxu0 %v2148
    %2455 = vmatpush1.bf16.msra.mxu0 %v2147
    %2456 = vmatprep.subr.bf16.mxu0 %v2155
    %2457 = vmatpush1.bf16.msra.mxu0 %v2154
    %2458 = vmatprep.subr.bf16.mxu0 %v2162
    %2459 = vmatpush1.bf16.msra.mxu0 %v2161
    %2460 = vmatprep.subr.bf16.mxu0 %v2169
    %2461 = vmatpush1.bf16.msra.mxu0 %v2168
    %2462 = vmatprep.subr.bf16.mxu0 %v2176
    %2463 = vmatpush1.bf16.msra.mxu0 %v2175
    %2464 = vmatprep.subr.bf16.mxu0 %v2183
    %2465 = vmatpush1.bf16.msra.mxu0 %v2182
    %2466 = vmatprep.subr.bf16.mxu0 %v2190
    %2467 = vmatpush1.bf16.msra.mxu0 %v2189
    %2468 = vmatprep.subr.bf16.mxu0 %v2197
    %2469 = vmatpush1.bf16.msra.mxu0 %v2196
    %2470 = vmatprep.subr.bf16.mxu0 %v2204
    %2471 = vmatpush1.bf16.msra.mxu0 %v2203
    %2472 = vmatprep.mubr.bf16.mxu0 %v1572
    %2473 = vmatmul.mubr.bf16.gmra.mrb[0].mxu0 %v1571
    %v2474 = vpop.f32.mrb[0].mxu0
    %v2475 = vadd.f32 %v1726, %v2474
    %v2476 = vpop.f32.mrb[0].mxu0
    %v2477 = vadd.f32 %v1730, %v2476
    %v2478 = vpop.f32.mrb[0].mxu0
    %v2479 = vadd.f32 %v1726, %v2478
    %v2480 = vpop.f32.mrb[0].mxu0
    %v2481 = vadd.f32 %v1730, %v2480
    %2482 = vmatprep.mubr.bf16.mxu0 %v1574
    %2483 = vmatmul.mubr.bf16.gmra.mrb[0].mxu0 %v1573
    %v2484 = vpop.f32.mrb[0].mxu0
    %v2485 = vadd.f32 %v1726, %v2484
    %v2486 = vpop.f32.mrb[0].mxu0
    %v2487 = vadd.f32 %v1730, %v2486
    %v2488 = vpop.f32.mrb[0].mxu0
    %v2489 = vadd.f32 %v1726, %v2488
    %v2490 = vpop.f32.mrb[0].mxu0
    %v2491 = vadd.f32 %v1730, %v2490
    %2492 = vmatprep.mubr.bf16.mxu0 %v1576
    %2493 = vmatmul.mubr.bf16.gmra.mrb[0].mxu0 %v1575
    %v2494 = vpop.f32.mrb[0].mxu0
    %v2495 = vadd.f32 %v1726, %v2494
    %v2496 = vpop.f32.mrb[0].mxu0
    %v2497 = vadd.f32 %v1730, %v2496
    %v2498 = vpop.f32.mrb[0].mxu0
    %v2499 = vpop.f32.mrb[0].mxu0
    %2500 = vdwg.mxu0
    %2501 = vmatprep.subr.bf16.mxu0 0
    %2502 = vmatpush1.bf16.msra.mxu0 %v2100
    %2503 = vmatprep.subr.bf16.mxu0 0
    %2504 = vmatpush1.bf16.msra.mxu0 %v2107
    %2505 = vmatprep.subr.bf16.mxu0 0
    %2506 = vmatpush1.bf16.msra.mxu0 %v2114
    %2507 = vmatprep.subr.bf16.mxu0 0
    %2508 = vmatpush1.bf16.msra.mxu0 %v2121
    %2509 = vmatprep.subr.bf16.mxu0 0
    %2510 = vmatpush1.bf16.msra.mxu0 %v2128
    %2511 = vmatprep.subr.bf16.mxu0 0
    %2512 = vmatpush1.bf16.msra.mxu0 %v2135
    %2513 = vmatprep.subr.bf16.mxu0 0
    %2514 = vmatpush1.bf16.msra.mxu0 %v2142
    %2515 = vmatprep.subr.bf16.mxu0 0
    %2516 = vmatpush1.bf16.msra.mxu0 %v2149
    %2517 = vmatprep.subr.bf16.mxu0 0
    %2518 = vmatpush1.bf16.msra.mxu0 %v2156
    %2519 = vmatprep.subr.bf16.mxu0 0
    %2520 = vmatpush1.bf16.msra.mxu0 %v2163
    %2521 = vmatprep.subr.bf16.mxu0 0
    %2522 = vmatpush1.bf16.msra.mxu0 %v2170
    %2523 = vmatprep.subr.bf16.mxu0 0
    %2524 = vmatpush1.bf16.msra.mxu0 %v2177
    %2525 = vmatprep.subr.bf16.mxu0 0
    %2526 = vmatpush1.bf16.msra.mxu0 %v2184
    %2527 = vmatprep.subr.bf16.mxu0 0
    %2528 = vmatpush1.bf16.msra.mxu0 %v2191
    %2529 = vmatprep.subr.bf16.mxu0 0
    %2530 = vmatpush1.bf16.msra.mxu0 %v2198
    %2531 = vmatprep.subr.bf16.mxu0 0
    %2532 = vmatpush1.bf16.msra.mxu0 %v2205
    %2533 = vmatprep.mubr.bf16.mxu0 %v1572
    %2534 = vmatmul.mubr.bf16.gmra.mrb[0].mxu0 %v1571
    %v2535 = vpop.f32.mrb[0].mxu0
    %v2536 = vadd.f32 %v1734, %v2535
    %v2537 = vpop.f32.mrb[0].mxu0
    %v2538 = vpop.f32.mrb[0].mxu0
    %v2539 = vadd.f32 %v1734, %v2538
    %v2540 = vpop.f32.mrb[0].mxu0
    %2541 = vmatprep.mubr.bf16.mxu0 %v1574
    %2542 = vmatmul.mubr.bf16.gmra.mrb[0].mxu0 %v1573
    %v2543 = vpop.f32.mrb[0].mxu0
    %v2544 = vadd.f32 %v1734, %v2543
    %v2545 = vpop.f32.mrb[0].mxu0
    %v2546 = vpop.f32.mrb[0].mxu0
    %v2547 = vadd.f32 %v1734, %v2546
    %v2548 = vpop.f32.mrb[0].mxu0
    %2549 = vmatprep.mubr.bf16.mxu0 %v1576
    %2550 = vmatmul.mubr.bf16.gmra.mrb[0].mxu0 %v1575
    %v2551 = vpop.f32.mrb[0].mxu0
    %v2552 = vadd.f32 %v1734, %v2551
    %v2553 = vpop.f32.mrb[0].mxu0
    %v2554 = vpop.f32.mrb[0].mxu0
    %v2555 = vpop.f32.mrb[0].mxu0
    %2556 = vdwg.mxu0
    %v2557 = vsub.f32 0.0, %v2353
    %v2558 = vsub.f32 0.0, %v2355
    %v2559 = vsub.f32 0.0, %v2414
    %v2560 = vsub.f32 0.0, %v2416
    %v2561 = vsub.f32 0.0, %v2475
    %v2562 = vsub.f32 0.0, %v2477
    %v2563 = vsub.f32 0.0, %v2536
    %v2564 = vsub.f32 0.0, %v2357
    %v2565 = vsub.f32 0.0, %v2359
    %v2566 = vsub.f32 0.0, %v2418
    %v2567 = vsub.f32 0.0, %v2420
    %v2568 = vsub.f32 0.0, %v2479
    %v2569 = vsub.f32 0.0, %v2481
    %v2570 = vsub.f32 0.0, %v2539
    %v2571 = vsub.f32 0.0, %v2363
    %v2572 = vsub.f32 0.0, %v2365
    %v2573 = vsub.f32 0.0, %v2424
    %v2574 = vsub.f32 0.0, %v2426
    %v2575 = vsub.f32 0.0, %v2485
    %v2576 = vsub.f32 0.0, %v2487
    %v2577 = vsub.f32 0.0, %v2544
    %v2578 = vsub.f32 0.0, %v2367
    %v2579 = vsub.f32 0.0, %v2369
    %v2580 = vsub.f32 0.0, %v2428
    %v2581 = vsub.f32 0.0, %v2430
    %v2582 = vsub.f32 0.0, %v2489
    %v2583 = vsub.f32 0.0, %v2491
    %v2584 = vsub.f32 0.0, %v2547
    %v2585 = vsub.f32 0.0, %v2373
    %v2586 = vsub.f32 0.0, %v2375
    %v2587 = vsub.f32 0.0, %v2434
    %v2588 = vsub.f32 0.0, %v2436
    %v2589 = vsub.f32 0.0, %v2495
    %v2590 = vsub.f32 0.0, %v2497
    %v2591 = vsub.f32 0.0, %v2552
    %v2592 = vmul.f32 %v2557, 1.442695
    %v2593 = vpow.pop %v2592
    %v2594 = vmul.f32 %v2558, 1.442695
    %v2595 = vpow.pop %v2594
    %v2596 = vmul.f32 %v2559, 1.442695
    %v2597 = vpow.pop %v2596
    %v2598 = vmul.f32 %v2560, 1.442695
    %v2599 = vpow.pop %v2598
    %v2600 = vmul.f32 %v2561, 1.442695
    %v2601 = vpow.pop %v2600
    %v2602 = vmul.f32 %v2562, 1.442695
    %v2603 = vpow.pop %v2602
    %v2604 = vmul.f32 %v2563, 1.442695
    %v2605 = vpow.pop %v2604
    %v2606 = vmul.f32 %v2564, 1.442695
    %v2607 = vpow.pop %v2606
    %v2608 = vmul.f32 %v2565, 1.442695
    %v2609 = vpow.pop %v2608
    %v2610 = vmul.f32 %v2566, 1.442695
    %v2611 = vpow.pop %v2610
    %v2612 = vmul.f32 %v2567, 1.442695
    %v2613 = vpow.pop %v2612
    %v2614 = vmul.f32 %v2568, 1.442695
    %v2615 = vpow.pop %v2614
    %v2616 = vmul.f32 %v2569, 1.442695
    %v2617 = vpow.pop %v2616
    %v2618 = vmul.f32 %v2570, 1.442695
    %v2619 = vpow.pop %v2618
    %v2620 = vmul.f32 %v2571, 1.442695
    %v2621 = vpow.pop %v2620
    %v2622 = vmul.f32 %v2572, 1.442695
    %v2623 = vpow.pop %v2622
    %v2624 = vmul.f32 %v2573, 1.442695
    %v2625 = vpow.pop %v2624
    %v2626 = vmul.f32 %v2574, 1.442695
    %v2627 = vpow.pop %v2626
    %v2628 = vmul.f32 %v2575, 1.442695
    %v2629 = vpow.pop %v2628
    %v2630 = vmul.f32 %v2576, 1.442695
    %v2631 = vpow.pop %v2630
    %v2632 = vmul.f32 %v2577, 1.442695
    %v2633 = vpow.pop %v2632
    %v2634 = vmul.f32 %v2578, 1.442695
    %v2635 = vpow.pop %v2634
    %v2636 = vmul.f32 %v2579, 1.442695
    %v2637 = vpow.pop %v2636
    %v2638 = vmul.f32 %v2580, 1.442695
    %v2639 = vpow.pop %v2638
    %v2640 = vmul.f32 %v2581, 1.442695
    %v2641 = vpow.pop %v2640
    %v2642 = vmul.f32 %v2582, 1.442695
    %v2643 = vpow.pop %v2642
    %v2644 = vmul.f32 %v2583, 1.442695
    %v2645 = vpow.pop %v2644
    %v2646 = vmul.f32 %v2584, 1.442695
    %v2647 = vpow.pop %v2646
    %v2648 = vmul.f32 %v2585, 1.442695
    %v2649 = vpow.pop %v2648
    %v2650 = vmul.f32 %v2586, 1.442695
    %v2651 = vpow.pop %v2650
    %v2652 = vmul.f32 %v2587, 1.442695
    %v2653 = vpow.pop %v2652
    %v2654 = vmul.f32 %v2588, 1.442695
    %v2655 = vpow.pop %v2654
    %v2656 = vmul.f32 %v2589, 1.442695
    %v2657 = vpow.pop %v2656
    %v2658 = vmul.f32 %v2590, 1.442695
    %v2659 = vpow.pop %v2658
    %v2660 = vmul.f32 %v2591, 1.442695
    %v2661 = vpow.pop %v2660
    %v2662 = vadd.f32 %v2593, 1.0
    %v2663 = vadd.f32 %v2595, 1.0
    %v2664 = vadd.f32 %v2597, 1.0
    %v2665 = vadd.f32 %v2599, 1.0
    %v2666 = vadd.f32 %v2601, 1.0
    %v2667 = vadd.f32 %v2603, 1.0
    %v2668 = vadd.f32 %v2605, 1.0
    %v2669 = vadd.f32 %v2607, 1.0
    %v2670 = vadd.f32 %v2609, 1.0
    %v2671 = vadd.f32 %v2611, 1.0
    %v2672 = vadd.f32 %v2613, 1.0
    %v2673 = vadd.f32 %v2615, 1.0
    %v2674 = vadd.f32 %v2617, 1.0
    %v2675 = vadd.f32 %v2619, 1.0
    %v2676 = vadd.f32 %v2621, 1.0
    %v2677 = vadd.f32 %v2623, 1.0
    %v2678 = vadd.f32 %v2625, 1.0
    %v2679 = vadd.f32 %v2627, 1.0
    %v2680 = vadd.f32 %v2629, 1.0
    %v2681 = vadd.f32 %v2631, 1.0
    %v2682 = vadd.f32 %v2633, 1.0
    %v2683 = vadd.f32 %v2635, 1.0
    %v2684 = vadd.f32 %v2637, 1.0
    %v2685 = vadd.f32 %v2639, 1.0
    %v2686 = vadd.f32 %v2641, 1.0
    %v2687 = vadd.f32 %v2643, 1.0
    %v2688 = vadd.f32 %v2645, 1.0
    %v2689 = vadd.f32 %v2647, 1.0
    %v2690 = vadd.f32 %v2649, 1.0
    %v2691 = vadd.f32 %v2651, 1.0
    %v2692 = vadd.f32 %v2653, 1.0
    %v2693 = vadd.f32 %v2655, 1.0
    %v2694 = vadd.f32 %v2657, 1.0
    %v2695 = vadd.f32 %v2659, 1.0
    %v2696 = vadd.f32 %v2661, 1.0
    %v2697 = vrcp.pop %v2662
    %v2698 = vrcp.pop %v2663
    %v2699 = vrcp.pop %v2664
    %v2700 = vrcp.pop %v2665
    %v2701 = vrcp.pop %v2666
    %v2702 = vrcp.pop %v2667
    %v2703 = vrcp.pop %v2668
    %v2704 = vrcp.pop %v2669
    %v2705 = vrcp.pop %v2670
    %v2706 = vrcp.pop %v2671
    %v2707 = vrcp.pop %v2672
    %v2708 = vrcp.pop %v2673
    %v2709 = vrcp.pop %v2674
    %v2710 = vrcp.pop %v2675
    %v2711 = vrcp.pop %v2676
    %v2712 = vrcp.pop %v2677
    %v2713 = vrcp.pop %v2678
    %v2714 = vrcp.pop %v2679
    %v2715 = vrcp.pop %v2680
    %v2716 = vrcp.pop %v2681
    %v2717 = vrcp.pop %v2682
    %v2718 = vrcp.pop %v2683
    %v2719 = vrcp.pop %v2684
    %v2720 = vrcp.pop %v2685
    %v2721 = vrcp.pop %v2686
    %v2722 = vrcp.pop %v2687
    %v2723 = vrcp.pop %v2688
    %v2724 = vrcp.pop %v2689
    %v2725 = vrcp.pop %v2690
    %v2726 = vrcp.pop %v2691
    %v2727 = vrcp.pop %v2692
    %v2728 = vrcp.pop %v2693
    %v2729 = vrcp.pop %v2694
    %v2730 = vrcp.pop %v2695
    %v2731 = vrcp.pop %v2696
    %v2732 = vpack.c.bf16 %v2704, %v2697
    %v2733 = vpack.c.bf16 %v2705, %v2698
    %v2734 = vpack.c.bf16 %v2706, %v2699
    %v2735 = vpack.c.bf16 %v2707, %v2700
    %v2736 = vpack.c.bf16 %v2708, %v2701
    %v2737 = vpack.c.bf16 %v2709, %v2702
    %v2738 = vpack.c.bf16 %v2710, %v2703
    %v2739 = vpack.c.bf16 %v2718, %v2711
    %v2740 = vpack.c.bf16 %v2719, %v2712
    %v2741 = vpack.c.bf16 %v2720, %v2713
    %v2742 = vpack.c.bf16 %v2721, %v2714
    %v2743 = vpack.c.bf16 %v2722, %v2715
    %v2744 = vpack.c.bf16 %v2723, %v2716
    %v2745 = vpack.c.bf16 %v2724, %v2717
    %v2746 = vpack.c.bf16 %v2725, %v2725
    %v2747 = vpack.c.bf16 %v2726, %v2726
    %v2748 = vpack.c.bf16 %v2727, %v2727
    %v2749 = vpack.c.bf16 %v2728, %v2728
    %v2750 = vpack.c.bf16 %v2729, %v2729
    %v2751 = vpack.c.bf16 %v2730, %v2730
    %v2752 = vpack.c.bf16 %v2731, %v2731
    %v2774 = vunpack.c.l.b16 %v2732
    %v2775 = vunpack.c.l.b16 %v2733
    %v2776 = vunpack.c.l.b16 %v2734
    %v2777 = vunpack.c.l.b16 %v2735
    %v2778 = vunpack.c.l.b16 %v2736
    %v2779 = vunpack.c.l.b16 %v2737
    %v2780 = vunpack.c.l.b16 %v2738
    %v2781 = vunpack.c.h.b16 %v2732
    %v2782 = vunpack.c.h.b16 %v2733
    %v2783 = vunpack.c.h.b16 %v2734
    %v2784 = vunpack.c.h.b16 %v2735
    %v2785 = vunpack.c.h.b16 %v2736
    %v2786 = vunpack.c.h.b16 %v2737
    %v2787 = vunpack.c.h.b16 %v2738
    %v2788 = vunpack.c.l.b16 %v2739
    %v2789 = vunpack.c.l.b16 %v2740
    %v2790 = vunpack.c.l.b16 %v2741
    %v2791 = vunpack.c.l.b16 %v2742
    %v2792 = vunpack.c.l.b16 %v2743
    %v2793 = vunpack.c.l.b16 %v2744
    %v2794 = vunpack.c.l.b16 %v2745
    %v2795 = vunpack.c.h.b16 %v2739
    %v2796 = vunpack.c.h.b16 %v2740
    %v2797 = vunpack.c.h.b16 %v2741
    %v2798 = vunpack.c.h.b16 %v2742
    %v2799 = vunpack.c.h.b16 %v2743
    %v2800 = vunpack.c.h.b16 %v2744
    %v2801 = vunpack.c.h.b16 %v2745
    %v2802 = vunpack.c.l.b16 %v2746
    %v2803 = vunpack.c.l.b16 %v2747
    %v2804 = vunpack.c.l.b16 %v2748
    %v2805 = vunpack.c.l.b16 %v2749
    %v2806 = vunpack.c.l.b16 %v2750
    %v2807 = vunpack.c.l.b16 %v2751
    %v2808 = vunpack.c.l.b16 %v2752
    %v2809 = vpack.c.b16 %v2775, %v2774
    %v2810 = vpack.c.b16 %v2777, %v2776
    %v2811 = vpack.c.b16 %v2779, %v2778
    %v2812 = vpack.c.b16 %v2780, %v2780
    %v2813 = vpack.c.b16 %v2782, %v2781
    %v2814 = vpack.c.b16 %v2784, %v2783
    %v2815 = vpack.c.b16 %v2786, %v2785
    %v2816 = vpack.c.b16 %v2787, %v2787
    %v2817 = vpack.c.b16 %v2789, %v2788
    %v2818 = vpack.c.b16 %v2791, %v2790
    %v2819 = vpack.c.b16 %v2793, %v2792
    %v2820 = vpack.c.b16 %v2794, %v2794
    %v2821 = vpack.c.b16 %v2796, %v2795
    %v2822 = vpack.c.b16 %v2798, %v2797
    %v2823 = vpack.c.b16 %v2800, %v2799
    %v2824 = vpack.c.b16 %v2801, %v2801
    %v2825 = vpack.c.b16 %v2803, %v2802
    %v2826 = vpack.c.b16 %v2805, %v2804
    %v2827 = vpack.c.b16 %v2807, %v2806
    %v2828 = vpack.c.b16 %v2808, %v2808
    %2849 = vst [vmem:[#allocation2] sm:$0xff] %v2809
    %2850 = vst [vmem:[#allocation2 + $0x8] sm:$0xff] %v2810
    %2851 = vst [vmem:[#allocation2 + $0x10] sm:$0xff] %v2811
    %vm2852 = vcmask 125952
    %2853 = vst.msk [vmem:[#allocation2 + $0x18] sm:$0xf] %vm2852, %v2812
    %2854 = vst [vmem:[#allocation2 + $0x1c] sm:$0xff] %v2813
    %2855 = vst [vmem:[#allocation2 + $0x24] sm:$0xff] %v2814
    %2856 = vst [vmem:[#allocation2 + $0x2c] sm:$0xff] %v2815
    %2857 = vst.msk [vmem:[#allocation2 + $0x34] sm:$0xf] %vm2852, %v2816
    %2858 = vst [vmem:[#allocation2 + $0x38] sm:$0xff] %v2817
    %2859 = vst [vmem:[#allocation2 + $0x40] sm:$0xff] %v2818
    %2860 = vst [vmem:[#allocation2 + $0x48] sm:$0xff] %v2819
    %2861 = vst.msk [vmem:[#allocation2 + $0x50] sm:$0xf] %vm2852, %v2820
    %2862 = vst [vmem:[#allocation2 + $0x54] sm:$0xff] %v2821
    %2863 = vst [vmem:[#allocation2 + $0x5c] sm:$0xff] %v2822
    %2864 = vst [vmem:[#allocation2 + $0x64] sm:$0xff] %v2823
    %2865 = vst.msk [vmem:[#allocation2 + $0x6c] sm:$0xf] %vm2852, %v2824
    %vm2866 = vcmask 1042432
    %vm2867 = vsmask.f32 2304
    %vm2868 = vmand %vm2866, %vm2867
    %vm2869 = vcmask 1046532
    %vm2870 = vsmask.f32 6400
    %vm2871 = vmand %vm2869, %vm2870
    %vm2872 = vmor %vm2871, %vm2868
    %v2873 = vld [vmem:[#allocation2 + $0x70] sm:$0x77]
    %v2874 = vsel %vm2872, %v2825, %v2873
    %2875 = vst [vmem:[#allocation2 + $0x70] sm:$0x77] %v2874
    %v2876 = vld [vmem:[#allocation2 + $0x78] sm:$0x77]
    %v2877 = vsel %vm2872, %v2826, %v2876
    %2878 = vst [vmem:[#allocation2 + $0x78] sm:$0x77] %v2877
    %v2879 = vld [vmem:[#allocation2 + $0x80] sm:$0x77]
    %v2880 = vsel %vm2872, %v2827, %v2879
    %2881 = vst [vmem:[#allocation2 + $0x80] sm:$0x77] %v2880
    %vm2882 = vcmask 124928
    %vm2883 = vmand %vm2882, %vm2867
    %v2884 = vld [vmem:[#allocation2 + $0x88] sm:$0x7]
    %v2885 = vsel %vm2883, %v2828, %v2884
    %2886 = vst [vmem:[#allocation2 + $0x88] sm:$0x7] %v2885
    // Predicated region
    $region54: #{tpu_custom_call.1} parent=1 // pred_check
      _
    $region55: #{tpu_custom_call.1} parent=1 // pred_check_branch
      %2888 = sbr.rel (0) target = $region57
    $region56: #{tpu_custom_call.1} parent=1 // pred_region
      %s2890 = ssub.s32 2240, 2240
      %2891 = vsyncadd [#allocation3], %s2890
      %s2892 = sshll.u32 [#allocation2], 4
      %s2893 = int_to_ptr.vmem [resolvable:$true] %s2892
      %2898 = dma.vmem_to_hbm [thread:$0]  %s2893, 2240, %s13, [#allocation3], 448, 448, 28
    $region57: #{tpu_custom_call.1} parent=1 // pred_fallthru
      _
    // Predicated region
    $region58: #{tpu_custom_call.1} parent=1 // pred_check
      _
    $region59: #{tpu_custom_call.1} parent=1 // pred_check_branch
      %2900 = sbr.rel (0) target = $region61
    $region60: #{tpu_custom_call.1} parent=1 // pred_region
      %2901 = dma.done [#allocation3], 2240
    $region61: #{tpu_custom_call.1} parent=1 // pred_fallthru
      _
    %2902 = vsyncpa [#allocation3], 1

</llo_original>
